<compile_context>
chip_gen: v5e
topology: v5e:2x2
jax: 0.10.0
libtpu: 0.0.40
codegen_flags: <defaults>
</compile_context>

<pallas_src>
import numpy as np
import jax
import jax.numpy as jnp
from jax import lax
from jax.experimental import pallas as pl
from jax.experimental.pallas import tpu as pltpu


# ----------------------------------------------------------------------------
# Small host-side helpers
# ----------------------------------------------------------------------------
def adaptive_pool_matrix(in_size, out_size):
    """Averaging matrix (in_size, out_size) matching torch AdaptiveAvgPool2d."""
    m = np.zeros((in_size, out_size), np.float32)
    for i in range(out_size):
        start = (i * in_size) // out_size
        end = -(-((i + 1) * in_size) // out_size)  # ceil division
        m[start:end, i] = 1.0 / (end - start)
    return m


def fold_bn(key, c, eps=1e-5):
    """Synthetic eval-mode BatchNorm folded to (scale, shift)."""
    k1, k2, k3, k4 = jax.random.split(key, 4)
    gamma = 1.0 + 0.1 * jax.random.normal(k1, (c,), jnp.float32)
    beta = 0.1 * jax.random.normal(k2, (c,), jnp.float32)
    running_mean = 0.1 * jax.random.normal(k3, (c,), jnp.float32)
    running_var = jnp.abs(1.0 + 0.1 * jax.random.normal(k4, (c,), jnp.float32))
    scale = gamma / jnp.sqrt(running_var + eps)
    shift = beta - running_mean * scale
    return scale, shift


def init_params(key, action_space_size, in_channels=3):
    ks = jax.random.split(key, 16)

    def rnd(k, shape, s=0.1):
        return (s * jax.random.normal(k, shape, jnp.float32)).astype(jnp.float32)

    return {
        # conv weights stored HWIO (kh, kw, Cin, Cout)
        "conv1_w": rnd(ks[0], (3, 3, in_channels, 8)),
        "bn1": fold_bn(ks[1], 8),
        "conv2_w": rnd(ks[2], (3, 3, 8, 8)),
        "bn2": fold_bn(ks[3], 8),
        "conv3_w": rnd(ks[4], (3, 3, 8, 8)),
        "bn3": fold_bn(ks[5], 8),
        "conv4_w": rnd(ks[6], (3, 3, 8, 16)),
        "bn4": fold_bn(ks[7], 16),
        # state_fc: Linear(96,64) -> ReLU -> Linear(64,1)   (math convention: x @ W + b)
        "w1s": rnd(ks[8], (96, 64)), "b1s": rnd(ks[9], (64,)),
        "w2s": rnd(ks[10], (64, 1)), "b2s": rnd(ks[11], (1,)),
        # advantage_fc: Linear(96,64) -> ReLU -> Linear(64,A)
        "w1a": rnd(ks[12], (96, 64)), "b1a": rnd(ks[13], (64,)),
        "w2a": rnd(ks[14], (64, action_space_size)),
        "b2a": rnd(ks[15], (action_space_size,)),
    }


def _round_up(x, m):
    return ((x + m - 1) // m) * m


# ----------------------------------------------------------------------------
# One-time constant folding (BN scale -> conv operators, even/odd & packed-row
# layouts, pool + NCHW-flatten permutation + block-diagonal head -> G).
# ----------------------------------------------------------------------------
def prepare_duel_qnet(params, action_space_size, in_channels, h0, w0):
    A = action_space_size

    def co(x, s):
        return (x - 3) // s + 1

    H1, W1 = co(h0, 2), co(w0, 2)
    H2, W2 = co(H1, 2), co(W1, 2)
    H3, W3 = co(H2, 1), co(W2, 1)
    H4, W4 = co(H3, 1), co(W3, 1)
    assert H4 >= 3 and W4 >= 4, "input too small for AdaptiveAvgPool2d((3, 4))"

    H1e, H1o = (H1 + 1) // 2, H1 // 2          # even / odd output rows of conv1
    P = (h0 + 3) // 4                          # packed rows (4 image rows each)
    assert H1e <= P and H1o + 1 <= P
    assert H2 + 1 <= H1e and H2 <= H1o

    C = [in_channels, 8, 8, 8, 16]
    Wd = [w0, W1, W2, W3, W4]
    L = [Wd[i] * C[i] for i in range(5)]           # valid lane widths per layer
    Lp = [_round_up(l, 128) for l in L]            # lane-dense padded widths
    L0p, L1p, L2p, L3p, L4p = Lp

    def lane_op(wname, bnname, li, stride):
        """Per-dy lane operator (padded) + padded BN shift, for layer li."""
        w = np.asarray(params[wname], np.float32)
        scale, shift = (np.asarray(t, np.float32) for t in params[bnname])
        cin, cout = C[li - 1], C[li]
        wout = Wd[li]
        wf = w * scale[None, None, None, :]        # fold BN scale into conv weight
        m = np.zeros((3, Lp[li - 1], Lp[li]), np.float32)
        for dy in range(3):
            for dx in range(3):
                for wo in range(wout):
                    wi = stride * wo + dx
                    m[dy, wi * cin:(wi + 1) * cin, wo * cout:(wo + 1) * cout] = wf[dy, dx]
        s = np.zeros((1, Lp[li]), np.float32)
        s[0, :wout * cout] = np.tile(shift, wout)
        return m, s

    m1, s1 = lane_op("conv1_w", "bn1", 1, 2)
    m2, s2 = lane_op("conv2_w", "bn2", 2, 2)
    m3, s3 = lane_op("conv3_w", "bn3", 3, 1)
    m4, s4 = lane_op("conv4_w", "bn4", 4, 1)

    consts = {}
    # conv1, even output rows: packed input row r holds image rows 4r..4r+3 in
    # lane blocks of L0p; even output row r needs phases 0,1,2 of block r.
    m1e = np.zeros((3 * L0p, L1p), np.float32)
    for dy in range(3):
        m1e[dy * L0p:(dy + 1) * L0p, :] = m1[dy]
    # conv1, odd output rows: phases 2,3 of block r (dy=0,1) + phase 0 of block r+1 (dy=2).
    m1oa = np.zeros((2 * L0p, L1p), np.float32)
    m1oa[0:L0p, :] = m1[0]
    m1oa[L0p:2 * L0p, :] = m1[1]
    consts["m1e"] = jnp.asarray(m1e)
    consts["m1oa"] = jnp.asarray(m1oa)
    consts["m1ob"] = jnp.asarray(m1[2])
    consts["s1"] = jnp.asarray(s1)

    # conv2: pk1 lanes [0:L1p]=even row r (dy=0), [L1p:2*L1p]=odd row r (dy=1);
    # dy=2 uses even row r+1 via a second matmul.
    m2a = np.zeros((2 * L1p, L2p), np.float32)
    m2a[0:L1p, :] = m2[0]
    m2a[L1p:2 * L1p, :] = m2[1]
    consts["m2a"] = jnp.asarray(m2a)
    consts["m2b"] = jnp.asarray(m2[2])
    consts["s2"] = jnp.asarray(s2)

    consts["m3"] = jnp.asarray(m3)
    consts["s3"] = jnp.asarray(s3)
    consts["m4"] = jnp.asarray(m4)
    consts["s4"] = jnp.asarray(s4)

    # --- pool + NCHW flatten + block-diagonal head layer 1, folded into G ---
    ph = adaptive_pool_matrix(H4, 3)           # (H4, 3)
    pw = adaptive_pool_matrix(W4, 4)           # (W4, 4)
    w1bd = np.zeros((192, 128), np.float32)    # torch-order rows, block-diag cols
    w1bd[:96, :64] = np.asarray(params["w1s"], np.float32)
    w1bd[96:, 64:] = np.asarray(params["w1a"], np.float32)
    # torch flatten index t = c*12 + i*4 + j  (c over 16 channels, i over 3, j over 4)
    g = np.einsum("hi,wj,cijo->hwco", ph, pw,
                  w1bd.reshape(16, 3, 4, 128)).reshape(H4, W4 * 16, 128)
    gp = np.zeros((H4, L4p, 128), np.float32)
    gp[:, :W4 * 16, :] = g
    consts["g"] = jnp.asarray(gp)
    consts["b1"] = jnp.concatenate(
        [params["b1s"], params["b1a"]]).reshape(1, 128).astype(jnp.float32)

    w2bd = np.zeros((128, 1 + A), np.float32)
    w2bd[:64, 0] = np.asarray(params["w2s"], np.float32)[:, 0]
    w2bd[64:, 1:] = np.asarray(params["w2a"], np.float32)
    consts["w2"] = jnp.asarray(w2bd)
    consts["b2"] = jnp.concatenate(
        [params["b2s"], params["b2a"]]).reshape(1, 1 + A).astype(jnp.float32)

    cfg = dict(A=A, C0=in_channels, H0=h0, W0=w0, P=P,
               H1e=H1e, H1o=H1o, H2=H2, H3=H3, H4=H4,
               L0=L[0], L0p=L0p, L1p=L1p, L2p=L2p, L3p=L3p, L4p=L4p)
    return {"cfg": cfg, "consts": consts}


# ----------------------------------------------------------------------------
# Fused Pallas kernel (one grid step == one batch sample)
# ----------------------------------------------------------------------------
def make_kernel(cfg):
    H1e, H1o = cfg["H1e"], cfg["H1o"]
    H2, H3, H4 = cfg["H2"], cfg["H3"], cfg["H4"]
    L0p, L1p = cfg["L0p"], cfg["L1p"]

    def kernel(xp, m1e, m1oa, m1ob, s1, m2a, m2b, s2, m3, s3, m4, s4,
               g, b1, w2, b2, o, pk1, y2, y3, y4):
        def dot(a, b):
            return jnp.dot(a, b, preferred_element_type=jnp.float32)

        # ---- conv1 + BN + ReLU (stride 2), even output rows: 1 matmul -------
        ev = jnp.maximum(dot(xp[0, 0:H1e, 0:3 * L0p], m1e[...]) + s1[...], 0.0)
        # ---- conv1, odd output rows: 2 matmuls (phases 2,3 of row r; phase 0 of row r+1)
        od = dot(xp[0, 0:H1o, 2 * L0p:4 * L0p], m1oa[...])
        od = od + dot(xp[0, 1:H1o + 1, 0:L0p], m1ob[...])
        od = jnp.maximum(od + s1[...], 0.0)
        # pack even/odd side by side so conv2 contracts both in one matmul
        pk1[0:H1e, 0:L1p] = ev                                   # (H1e, L1p)
        pk1[0:H1o, L1p:2 * L1p] = od                             # (H1o, L1p)
        if H1e > H1o:   # keep unread odd rows finite (defensive; never contracted)
            pk1[H1o:H1e, L1p:2 * L1p] = jnp.zeros((H1e - H1o, L1p), jnp.float32)

        # ---- conv2 + BN + ReLU (stride 2 over conv1 rows): 2 matmuls --------
        a2 = dot(pk1[0:H2, :], m2a[...]) + dot(pk1[1:H2 + 1, 0:L1p], m2b[...])
        y2[...] = jnp.maximum(a2 + s2[...], 0.0)                 # (H2, L2p)

        # ---- conv3 + BN + ReLU (stride 1) ------------------------------------
        a3 = dot(y2[0:H3, :], m3[0])
        a3 = a3 + dot(y2[1:H3 + 1, :], m3[1])
        a3 = a3 + dot(y2[2:H3 + 2, :], m3[2])
        y3[...] = jnp.maximum(a3 + s3[...], 0.0)                 # (H3, L3p)

        # ---- conv4 + BN + ReLU (stride 1) ------------------------------------
        a4 = dot(y3[0:H4, :], m4[0])
        a4 = a4 + dot(y3[1:H4 + 1, :], m4[1])
        a4 = a4 + dot(y3[2:H4 + 2, :], m4[2])
        y4[...] = jnp.maximum(a4 + s4[...], 0.0)                 # (H4, L4p)

        # ---- adaptive pool + head layer 1 (folded into G, block-diag) --------
        hid = dot(y4[0:1, :], g[0])
        for hh in range(1, H4):
            hid = hid + dot(y4[hh:hh + 1, :], g[hh])
        hid = jnp.maximum(hid + b1[...], 0.0)                    # (1, 128) lane-dense

        # ---- head layer 2 (block-diag) + dueling combine ----------------------
        va = dot(hid, w2[...]) + b2[...]                         # (1, 1 + A)
        v = va[:, 0:1]
        adv = va[:, 1:]
        o[0, :, :] = v + (adv - jnp.mean(adv, axis=1, keepdims=True))

    return kernel


# ----------------------------------------------------------------------------
# Forward pass: NCHW -> channels-last lanes -> 4-row lane packing -> one pallas_call
# ----------------------------------------------------------------------------
def duel_qnet_forward(prep, x_nchw):
    cfg, c = prep["cfg"], prep["consts"]
    N, C0, H0, W0 = x_nchw.shape
    assert (C0, H0, W0) == (cfg["C0"], cfg["H0"], cfg["W0"])
    P, A = cfg["P"], cfg["A"]
    L0, L0p = cfg["L0"], cfg["L0p"]
    L1p, L2p, L3p, L4p = cfg["L1p"], cfg["L2p"], cfg["L3p"], cfg["L4p"]
    H1e, H2, H3, H4 = cfg["H1e"], cfg["H2"], cfg["H3"], cfg["H4"]

    # NCHW -> NHWC -> (N, H, W*C), pad lanes to 128 and rows to 4*P, then pack
    # 4 consecutive rows into one lane row: (N, P, 4*L0p)
    x = jnp.transpose(x_nchw, (0, 2, 3, 1)).astype(jnp.float32).reshape(N, H0, L0)
    x = jnp.pad(x, ((0, 0), (0, 4 * P - H0), (0, L0p - L0)))
    xp = x.reshape(N, P, 4 * L0p)

    kernel = make_kernel(cfg)
    out = pl.pallas_call(
        kernel,
        out_shape=jax.ShapeDtypeStruct((N, 1, A), jnp.float32),
        grid=(N,),
        in_specs=[
            pl.BlockSpec((1, P, 4 * L0p), lambda i: (i, 0, 0)),
            pl.BlockSpec(c["m1e"].shape, lambda i: (0, 0)),
            pl.BlockSpec(c["m1oa"].shape, lambda i: (0, 0)),
            pl.BlockSpec(c["m1ob"].shape, lambda i: (0, 0)),
            pl.BlockSpec(c["s1"].shape, lambda i: (0, 0)),
            pl.BlockSpec(c["m2a"].shape, lambda i: (0, 0)),
            pl.BlockSpec(c["m2b"].shape, lambda i: (0, 0)),
            pl.BlockSpec(c["s2"].shape, lambda i: (0, 0)),
            pl.BlockSpec(c["m3"].shape, lambda i: (0, 0, 0)),
            pl.BlockSpec(c["s3"].shape, lambda i: (0, 0)),
            pl.BlockSpec(c["m4"].shape, lambda i: (0, 0, 0)),
            pl.BlockSpec(c["s4"].shape, lambda i: (0, 0)),
            pl.BlockSpec(c["g"].shape, lambda i: (0, 0, 0)),
            pl.BlockSpec(c["b1"].shape, lambda i: (0, 0)),
            pl.BlockSpec(c["w2"].shape, lambda i: (0, 0)),
            pl.BlockSpec(c["b2"].shape, lambda i: (0, 0)),
        ],
        out_specs=pl.BlockSpec((1, 1, A), lambda i: (i, 0, 0)),
        scratch_shapes=[
            pltpu.VMEM((H1e, 2 * L1p), jnp.float32),   # packed conv1 even|odd rows
            pltpu.VMEM((H2, L2p), jnp.float32),
            pltpu.VMEM((H3, L3p), jnp.float32),
            pltpu.VMEM((H4, L4p), jnp.float32),
        ],
        compiler_params=pltpu.CompilerParams(
            dimension_semantics=("parallel",)),
    )(xp, c["m1e"], c["m1oa"], c["m1ob"], c["s1"], c["m2a"], c["m2b"], c["s2"],
      c["m3"], c["s3"], c["m4"], c["s4"], c["g"], c["b1"], c["w2"], c["b2"])
    return out.reshape(N, A)


# ----------------------------------------------------------------------------
# Plain-JAX reference (semantics of the PyTorch module) for verification
# ----------------------------------------------------------------------------
def reference_forward(params, x_nchw):
    x = jnp.transpose(x_nchw, (0, 2, 3, 1)).astype(jnp.float32)

    def conv_bn_relu(y, w, bn, stride):
        scale, shift = bn
        y = lax.conv_general_dilated(
            y, w, (stride, stride), "VALID",
            dimension_numbers=("NHWC", "HWIO", "NHWC"))
        return jnp.maximum(y * scale + shift, 0.0)

    x = conv_bn_relu(x, params["conv1_w"], params["bn1"], 2)
    x = conv_bn_relu(x, params["conv2_w"], params["bn2"], 2)
    x = conv_bn_relu(x, params["conv3_w"], params["bn3"], 1)
    x = conv_bn_relu(x, params["conv4_w"], params["bn4"], 1)

    n, hf, wf, cc = x.shape
    ph = jnp.asarray(adaptive_pool_matrix(hf, 3))
    pw = jnp.asarray(adaptive_pool_matrix(wf, 4))
    pooled = jnp.einsum("nhwc,hp,wq->npqc", x, ph, pw)           # (N, 3, 4, 16)
    feat = jnp.transpose(pooled, (0, 3, 1, 2)).reshape(-1, 192)  # torch view(-1,192)

    h_s = jnp.maximum(feat[:, :96] @ params["w1s"] + params["b1s"], 0.0)
    v = h_s @ params["w2s"] + params["b2s"]
    h_a = jnp.maximum(feat[:, 96:] @ params["w1a"] + params["b1a"], 0.0)
    adv = h_a @ params["w2a"] + params["b2a"]
    return v + (adv - jnp.mean(adv, axis=1, keepdims=True))


if __name__ == "__main__":
    key = jax.random.PRNGKey(0)
    pkey, xkey = jax.random.split(key)

    ACTION_SPACE = 6
    IN_CH, H, W = 3, 36, 40   # 36x40 -> 17x19 -> 8x9 -> 6x7 -> 4x5 -> pool(3,4)
    params = init_params(pkey, ACTION_SPACE, IN_CH)
    x = jax.random.normal(xkey, (2, IN_CH, H, W), jnp.float32)

    prep = prepare_duel_qnet(params, ACTION_SPACE, IN_CH, H, W)
    fwd = jax.jit(lambda inp: duel_qnet_forward(prep, inp))
    out = jax.block_until_ready(fwd(x))

    assert out.shape == (2, ACTION_SPACE), out.shape
    assert bool(jnp.all(jnp.isfinite(out)))

    ref = jax.block_until_ready(reference_forward(params, x))
    err = float(jnp.max(jnp.abs(out - ref)))
    assert err < 2e-2, f"mismatch vs reference: {err}"

    print("KERNEL_OK")
</pallas_src>

<mosaic_0001>
module attributes {stable_mosaic.version = 11 : i64} {
  func.func @kernel(%arg0: i32, %arg1: memref<1x9x512xf32, #tpu.memory_space<vmem>>, %arg2: memref<384x256xf32, #tpu.memory_space<vmem>>, %arg3: memref<256x256xf32, #tpu.memory_space<vmem>>, %arg4: memref<128x256xf32, #tpu.memory_space<vmem>>, %arg5: memref<1x256xf32, #tpu.memory_space<vmem>>, %arg6: memref<512x128xf32, #tpu.memory_space<vmem>>, %arg7: memref<256x128xf32, #tpu.memory_space<vmem>>, %arg8: memref<1x128xf32, #tpu.memory_space<vmem>>, %arg9: memref<3x128x128xf32, #tpu.memory_space<vmem>>, %arg10: memref<1x128xf32, #tpu.memory_space<vmem>>, %arg11: memref<3x128x128xf32, #tpu.memory_space<vmem>>, %arg12: memref<1x128xf32, #tpu.memory_space<vmem>>, %arg13: memref<4x128x128xf32, #tpu.memory_space<vmem>>, %arg14: memref<1x128xf32, #tpu.memory_space<vmem>>, %arg15: memref<128x7xf32, #tpu.memory_space<vmem>>, %arg16: memref<1x7xf32, #tpu.memory_space<vmem>>, %arg17: memref<1x1x6xf32, #tpu.memory_space<vmem>>, %arg18: memref<9x512xf32, #tpu.memory_space<vmem>>, %arg19: memref<8x128xf32, #tpu.memory_space<vmem>>, %arg20: memref<6x128xf32, #tpu.memory_space<vmem>>, %arg21: memref<4x128xf32, #tpu.memory_space<vmem>>) attributes {dimension_semantics = [#tpu.dimension_semantics<parallel>], iteration_bounds = array<i64: 2>, scalar_prefetch = 0 : i64, scratch_operands = 4 : i64, tpu.core_type = #tpu.core_type<tc>, window_params = [{transform_indices = @transform_0, window_bounds = array<i64: 1, 9, 512>}, {pipeline_mode = #tpu.pipeline_mode<synchronous>, transform_indices = @transform_1, window_bounds = array<i64: 384, 256>}, {pipeline_mode = #tpu.pipeline_mode<synchronous>, transform_indices = @transform_2, window_bounds = array<i64: 256, 256>}, {pipeline_mode = #tpu.pipeline_mode<synchronous>, transform_indices = @transform_3, window_bounds = array<i64: 128, 256>}, {pipeline_mode = #tpu.pipeline_mode<synchronous>, transform_indices = @transform_4, window_bounds = array<i64: 1, 256>}, {pipeline_mode = #tpu.pipeline_mode<synchronous>, transform_indices = @transform_5, window_bounds = array<i64: 512, 128>}, {pipeline_mode = #tpu.pipeline_mode<synchronous>, transform_indices = @transform_6, window_bounds = array<i64: 256, 128>}, {pipeline_mode = #tpu.pipeline_mode<synchronous>, transform_indices = @transform_7, window_bounds = array<i64: 1, 128>}, {pipeline_mode = #tpu.pipeline_mode<synchronous>, transform_indices = @transform_8, window_bounds = array<i64: 3, 128, 128>}, {pipeline_mode = #tpu.pipeline_mode<synchronous>, transform_indices = @transform_9, window_bounds = array<i64: 1, 128>}, {pipeline_mode = #tpu.pipeline_mode<synchronous>, transform_indices = @transform_10, window_bounds = array<i64: 3, 128, 128>}, {pipeline_mode = #tpu.pipeline_mode<synchronous>, transform_indices = @transform_11, window_bounds = array<i64: 1, 128>}, {pipeline_mode = #tpu.pipeline_mode<synchronous>, transform_indices = @transform_12, window_bounds = array<i64: 4, 128, 128>}, {pipeline_mode = #tpu.pipeline_mode<synchronous>, transform_indices = @transform_13, window_bounds = array<i64: 1, 128>}, {pipeline_mode = #tpu.pipeline_mode<synchronous>, transform_indices = @transform_14, window_bounds = array<i64: 128, 7>}, {pipeline_mode = #tpu.pipeline_mode<synchronous>, transform_indices = @transform_15, window_bounds = array<i64: 1, 7>}, {transform_indices = @transform_16, window_bounds = array<i64: 1, 1, 6>}]} {
    %c0 = arith.constant 0 : index
    %c0_0 = arith.constant 0 : index
    %c0_1 = arith.constant 0 : index
    %0 = vector.load %arg1[%c0, %c0_0, %c0_1] : memref<1x9x512xf32, #tpu.memory_space<vmem>>, vector<1x9x384xf32>
    %1 = vector.shape_cast %0 : vector<1x9x384xf32> to vector<9x384xf32>
    %c0_2 = arith.constant 0 : index
    %c0_3 = arith.constant 0 : index
    %2 = vector.load %arg2[%c0_2, %c0_3] : memref<384x256xf32, #tpu.memory_space<vmem>>, vector<384x256xf32>
    %cst = arith.constant dense<0.000000e+00> : vector<9x256xf32>
    %3 = tpu.matmul %1, %2, %cst {dimension_numbers = #tpu.dot_dimension_numbers<[1], [0], [0], [1], [0, 0, 1, 1], [], []>} : vector<9x384xf32>, vector<384x256xf32>, vector<9x256xf32> -> vector<9x256xf32>
    %c0_4 = arith.constant 0 : index
    %c0_5 = arith.constant 0 : index
    %4 = vector.load %arg5[%c0_4, %c0_5] : memref<1x256xf32, #tpu.memory_space<vmem>>, vector<1x256xf32>
    %5 = vector.broadcast %4 : vector<1x256xf32> to vector<9x256xf32>
    %6 = arith.addf %3, %5 : vector<9x256xf32>
    %cst_6 = arith.constant 0.000000e+00 : f32
    %7 = vector.broadcast %cst_6 : f32 to vector<9x256xf32>
    %8 = arith.maximumf %6, %7 : vector<9x256xf32>
    %c0_7 = arith.constant 0 : index
    %c0_8 = arith.constant 0 : index
    %c256 = arith.constant 256 : index
    %9 = vector.load %arg1[%c0_7, %c0_8, %c256] : memref<1x9x512xf32, #tpu.memory_space<vmem>>, vector<1x8x256xf32>
    %10 = vector.shape_cast %9 : vector<1x8x256xf32> to vector<8x256xf32>
    %c0_9 = arith.constant 0 : index
    %c0_10 = arith.constant 0 : index
    %11 = vector.load %arg3[%c0_9, %c0_10] : memref<256x256xf32, #tpu.memory_space<vmem>>, vector<256x256xf32>
    %cst_11 = arith.constant dense<0.000000e+00> : vector<8x256xf32>
    %12 = tpu.matmul %10, %11, %cst_11 {dimension_numbers = #tpu.dot_dimension_numbers<[1], [0], [0], [1], [0, 0, 1, 1], [], []>} : vector<8x256xf32>, vector<256x256xf32>, vector<8x256xf32> -> vector<8x256xf32>
    %c0_12 = arith.constant 0 : index
    %c1 = arith.constant 1 : index
    %c0_13 = arith.constant 0 : index
    %13 = vector.load %arg1[%c0_12, %c1, %c0_13] : memref<1x9x512xf32, #tpu.memory_space<vmem>>, vector<1x8x128xf32>
    %14 = vector.shape_cast %13 : vector<1x8x128xf32> to vector<8x128xf32>
    %c0_14 = arith.constant 0 : index
    %c0_15 = arith.constant 0 : index
    %15 = vector.load %arg4[%c0_14, %c0_15] : memref<128x256xf32, #tpu.memory_space<vmem>>, vector<128x256xf32>
    %cst_16 = arith.constant dense<0.000000e+00> : vector<8x256xf32>
    %16 = tpu.matmul %14, %15, %cst_16 {dimension_numbers = #tpu.dot_dimension_numbers<[1], [0], [0], [1], [0, 0, 1, 1], [], []>} : vector<8x128xf32>, vector<128x256xf32>, vector<8x256xf32> -> vector<8x256xf32>
    %17 = arith.addf %12, %16 : vector<8x256xf32>
    %c0_17 = arith.constant 0 : index
    %c0_18 = arith.constant 0 : index
    %18 = vector.load %arg5[%c0_17, %c0_18] : memref<1x256xf32, #tpu.memory_space<vmem>>, vector<1x256xf32>
    %19 = vector.broadcast %18 : vector<1x256xf32> to vector<8x256xf32>
    %20 = arith.addf %17, %19 : vector<8x256xf32>
    %cst_19 = arith.constant 0.000000e+00 : f32
    %21 = vector.broadcast %cst_19 : f32 to vector<8x256xf32>
    %22 = arith.maximumf %20, %21 : vector<8x256xf32>
    %c0_20 = arith.constant 0 : index
    %c0_21 = arith.constant 0 : index
    %23 = vector.load %arg18[%c0_20, %c0_21] : memref<9x512xf32, #tpu.memory_space<vmem>>, vector<9x256xf32>
    tpu.vector_store %arg18[%c0_20, %c0_21], %8 {strides = array<i32>} : memref<9x512xf32, #tpu.memory_space<vmem>>, vector<9x256xf32>,
    %c0_22 = arith.constant 0 : index
    %c256_23 = arith.constant 256 : index
    %24 = vector.load %arg18[%c0_22, %c256_23] : memref<9x512xf32, #tpu.memory_space<vmem>>, vector<8x256xf32>
    tpu.vector_store %arg18[%c0_22, %c256_23], %22 {strides = array<i32>} : memref<9x512xf32, #tpu.memory_space<vmem>>, vector<8x256xf32>,
    %cst_24 = arith.constant 0.000000e+00 : f32
    %25 = vector.broadcast %cst_24 : f32 to vector<1x256xf32>
    %c8 = arith.constant 8 : index
    %c256_25 = arith.constant 256 : index
    %26 = vector.load %arg18[%c8, %c256_25] : memref<9x512xf32, #tpu.memory_space<vmem>>, vector<1x256xf32>
    tpu.vector_store %arg18[%c8, %c256_25], %25 {strides = array<i32>} : memref<9x512xf32, #tpu.memory_space<vmem>>, vector<1x256xf32>,
    %c0_26 = arith.constant 0 : index
    %c0_27 = arith.constant 0 : index
    %27 = vector.load %arg18[%c0_26, %c0_27] : memref<9x512xf32, #tpu.memory_space<vmem>>, vector<8x512xf32>
    %c0_28 = arith.constant 0 : index
    %c0_29 = arith.constant 0 : index
    %28 = vector.load %arg6[%c0_28, %c0_29] : memref<512x128xf32, #tpu.memory_space<vmem>>, vector<512x128xf32>
    %cst_30 = arith.constant dense<0.000000e+00> : vector<8x128xf32>
    %29 = tpu.matmul %27, %28, %cst_30 {dimension_numbers = #tpu.dot_dimension_numbers<[1], [0], [0], [1], [0, 0, 1, 1], [], []>} : vector<8x512xf32>, vector<512x128xf32>, vector<8x128xf32> -> vector<8x128xf32>
    %c1_31 = arith.constant 1 : index
    %c0_32 = arith.constant 0 : index
    %30 = vector.load %arg18[%c1_31, %c0_32] : memref<9x512xf32, #tpu.memory_space<vmem>>, vector<8x256xf32>
    %c0_33 = arith.constant 0 : index
    %c0_34 = arith.constant 0 : index
    %31 = vector.load %arg7[%c0_33, %c0_34] : memref<256x128xf32, #tpu.memory_space<vmem>>, vector<256x128xf32>
    %cst_35 = arith.constant dense<0.000000e+00> : vector<8x128xf32>
    %32 = tpu.matmul %30, %31, %cst_35 {dimension_numbers = #tpu.dot_dimension_numbers<[1], [0], [0], [1], [0, 0, 1, 1], [], []>} : vector<8x256xf32>, vector<256x128xf32>, vector<8x128xf32> -> vector<8x128xf32>
    %33 = arith.addf %29, %32 : vector<8x128xf32>
    %c0_36 = arith.constant 0 : index
    %c0_37 = arith.constant 0 : index
    %34 = vector.load %arg8[%c0_36, %c0_37] : memref<1x128xf32, #tpu.memory_space<vmem>>, vector<1x128xf32>
    %35 = vector.broadcast %34 : vector<1x128xf32> to vector<8x128xf32>
    %36 = arith.addf %33, %35 : vector<8x128xf32>
    %cst_38 = arith.constant 0.000000e+00 : f32
    %37 = vector.broadcast %cst_38 : f32 to vector<8x128xf32>
    %38 = arith.maximumf %36, %37 : vector<8x128xf32>
    %c0_39 = arith.constant 0 : index
    %c0_40 = arith.constant 0 : index
    %39 = vector.load %arg19[%c0_39, %c0_40] : memref<8x128xf32, #tpu.memory_space<vmem>>, vector<8x128xf32>
    tpu.vector_store %arg19[%c0_39, %c0_40], %38 {strides = array<i32>} : memref<8x128xf32, #tpu.memory_space<vmem>>, vector<8x128xf32>,
    %c0_41 = arith.constant 0 : index
    %c0_42 = arith.constant 0 : index
    %40 = vector.load %arg19[%c0_41, %c0_42] : memref<8x128xf32, #tpu.memory_space<vmem>>, vector<6x128xf32>
    %c0_43 = arith.constant 0 : index
    %c0_44 = arith.constant 0 : index
    %c0_45 = arith.constant 0 : index
    %41 = vector.load %arg9[%c0_43, %c0_44, %c0_45] : memref<3x128x128xf32, #tpu.memory_space<vmem>>, vector<1x128x128xf32>
    %42 = vector.shape_cast %41 : vector<1x128x128xf32> to vector<128x128xf32>
    %cst_46 = arith.constant dense<0.000000e+00> : vector<6x128xf32>
    %43 = tpu.matmul %40, %42, %cst_46 {dimension_numbers = #tpu.dot_dimension_numbers<[1], [0], [0], [1], [0, 0, 1, 1], [], []>} : vector<6x128xf32>, vector<128x128xf32>, vector<6x128xf32> -> vector<6x128xf32>
    %c1_47 = arith.constant 1 : index
    %c0_48 = arith.constant 0 : index
    %44 = vector.load %arg19[%c1_47, %c0_48] : memref<8x128xf32, #tpu.memory_space<vmem>>, vector<6x128xf32>
    %c1_49 = arith.constant 1 : index
    %c0_50 = arith.constant 0 : index
    %c0_51 = arith.constant 0 : index
    %45 = vector.load %arg9[%c1_49, %c0_50, %c0_51] : memref<3x128x128xf32, #tpu.memory_space<vmem>>, vector<1x128x128xf32>
    %46 = vector.shape_cast %45 : vector<1x128x128xf32> to vector<128x128xf32>
    %cst_52 = arith.constant dense<0.000000e+00> : vector<6x128xf32>
    %47 = tpu.matmul %44, %46, %cst_52 {dimension_numbers = #tpu.dot_dimension_numbers<[1], [0], [0], [1], [0, 0, 1, 1], [], []>} : vector<6x128xf32>, vector<128x128xf32>, vector<6x128xf32> -> vector<6x128xf32>
    %48 = arith.addf %43, %47 : vector<6x128xf32>
    %c2 = arith.constant 2 : index
    %c0_53 = arith.constant 0 : index
    %49 = vector.load %arg19[%c2, %c0_53] : memref<8x128xf32, #tpu.memory_space<vmem>>, vector<6x128xf32>
    %c2_54 = arith.constant 2 : index
    %c0_55 = arith.constant 0 : index
    %c0_56 = arith.constant 0 : index
    %50 = vector.load %arg9[%c2_54, %c0_55, %c0_56] : memref<3x128x128xf32, #tpu.memory_space<vmem>>, vector<1x128x128xf32>
    %51 = vector.shape_cast %50 : vector<1x128x128xf32> to vector<128x128xf32>
    %cst_57 = arith.constant dense<0.000000e+00> : vector<6x128xf32>
    %52 = tpu.matmul %49, %51, %cst_57 {dimension_numbers = #tpu.dot_dimension_numbers<[1], [0], [0], [1], [0, 0, 1, 1], [], []>} : vector<6x128xf32>, vector<128x128xf32>, vector<6x128xf32> -> vector<6x128xf32>
    %53 = arith.addf %48, %52 : vector<6x128xf32>
    %c0_58 = arith.constant 0 : index
    %c0_59 = arith.constant 0 : index
    %54 = vector.load %arg10[%c0_58, %c0_59] : memref<1x128xf32, #tpu.memory_space<vmem>>, vector<1x128xf32>
    %55 = vector.broadcast %54 : vector<1x128xf32> to vector<6x128xf32>
    %56 = arith.addf %53, %55 : vector<6x128xf32>
    %cst_60 = arith.constant 0.000000e+00 : f32
    %57 = vector.broadcast %cst_60 : f32 to vector<6x128xf32>
    %58 = arith.maximumf %56, %57 : vector<6x128xf32>
    %c0_61 = arith.constant 0 : index
    %c0_62 = arith.constant 0 : index
    %59 = vector.load %arg20[%c0_61, %c0_62] : memref<6x128xf32, #tpu.memory_space<vmem>>, vector<6x128xf32>
    tpu.vector_store %arg20[%c0_61, %c0_62], %58 {strides = array<i32>} : memref<6x128xf32, #tpu.memory_space<vmem>>, vector<6x128xf32>,
    %c0_63 = arith.constant 0 : index
    %c0_64 = arith.constant 0 : index
    %60 = vector.load %arg20[%c0_63, %c0_64] : memref<6x128xf32, #tpu.memory_space<vmem>>, vector<4x128xf32>
    %c0_65 = arith.constant 0 : index
    %c0_66 = arith.constant 0 : index
    %c0_67 = arith.constant 0 : index
    %61 = vector.load %arg11[%c0_65, %c0_66, %c0_67] : memref<3x128x128xf32, #tpu.memory_space<vmem>>, vector<1x128x128xf32>
    %62 = vector.shape_cast %61 : vector<1x128x128xf32> to vector<128x128xf32>
    %cst_68 = arith.constant dense<0.000000e+00> : vector<4x128xf32>
    %63 = tpu.matmul %60, %62, %cst_68 {dimension_numbers = #tpu.dot_dimension_numbers<[1], [0], [0], [1], [0, 0, 1, 1], [], []>} : vector<4x128xf32>, vector<128x128xf32>, vector<4x128xf32> -> vector<4x128xf32>
    %c1_69 = arith.constant 1 : index
    %c0_70 = arith.constant 0 : index
    %64 = vector.load %arg20[%c1_69, %c0_70] : memref<6x128xf32, #tpu.memory_space<vmem>>, vector<4x128xf32>
    %c1_71 = arith.constant 1 : index
    %c0_72 = arith.constant 0 : index
    %c0_73 = arith.constant 0 : index
    %65 = vector.load %arg11[%c1_71, %c0_72, %c0_73] : memref<3x128x128xf32, #tpu.memory_space<vmem>>, vector<1x128x128xf32>
    %66 = vector.shape_cast %65 : vector<1x128x128xf32> to vector<128x128xf32>
    %cst_74 = arith.constant dense<0.000000e+00> : vector<4x128xf32>
    %67 = tpu.matmul %64, %66, %cst_74 {dimension_numbers = #tpu.dot_dimension_numbers<[1], [0], [0], [1], [0, 0, 1, 1], [], []>} : vector<4x128xf32>, vector<128x128xf32>, vector<4x128xf32> -> vector<4x128xf32>
    %68 = arith.addf %63, %67 : vector<4x128xf32>
    %c2_75 = arith.constant 2 : index
    %c0_76 = arith.constant 0 : index
    %69 = vector.load %arg20[%c2_75, %c0_76] : memref<6x128xf32, #tpu.memory_space<vmem>>, vector<4x128xf32>
    %c2_77 = arith.constant 2 : index
    %c0_78 = arith.constant 0 : index
    %c0_79 = arith.constant 0 : index
    %70 = vector.load %arg11[%c2_77, %c0_78, %c0_79] : memref<3x128x128xf32, #tpu.memory_space<vmem>>, vector<1x128x128xf32>
    %71 = vector.shape_cast %70 : vector<1x128x128xf32> to vector<128x128xf32>
    %cst_80 = arith.constant dense<0.000000e+00> : vector<4x128xf32>
    %72 = tpu.matmul %69, %71, %cst_80 {dimension_numbers = #tpu.dot_dimension_numbers<[1], [0], [0], [1], [0, 0, 1, 1], [], []>} : vector<4x128xf32>, vector<128x128xf32>, vector<4x128xf32> -> vector<4x128xf32>
    %73 = arith.addf %68, %72 : vector<4x128xf32>
    %c0_81 = arith.constant 0 : index
    %c0_82 = arith.constant 0 : index
    %74 = vector.load %arg12[%c0_81, %c0_82] : memref<1x128xf32, #tpu.memory_space<vmem>>, vector<1x128xf32>
    %75 = vector.broadcast %74 : vector<1x128xf32> to vector<4x128xf32>
    %76 = arith.addf %73, %75 : vector<4x128xf32>
    %cst_83 = arith.constant 0.000000e+00 : f32
    %77 = vector.broadcast %cst_83 : f32 to vector<4x128xf32>
    %78 = arith.maximumf %76, %77 : vector<4x128xf32>
    %c0_84 = arith.constant 0 : index
    %c0_85 = arith.constant 0 : index
    %79 = vector.load %arg21[%c0_84, %c0_85] : memref<4x128xf32, #tpu.memory_space<vmem>>, vector<4x128xf32>
    tpu.vector_store %arg21[%c0_84, %c0_85], %78 {strides = array<i32>} : memref<4x128xf32, #tpu.memory_space<vmem>>, vector<4x128xf32>,
    %c0_86 = arith.constant 0 : index
    %c0_87 = arith.constant 0 : index
    %80 = vector.load %arg21[%c0_86, %c0_87] : memref<4x128xf32, #tpu.memory_space<vmem>>, vector<1x128xf32>
    %c0_88 = arith.constant 0 : index
    %c0_89 = arith.constant 0 : index
    %c0_90 = arith.constant 0 : index
    %81 = vector.load %arg13[%c0_88, %c0_89, %c0_90] : memref<4x128x128xf32, #tpu.memory_space<vmem>>, vector<1x128x128xf32>
    %82 = vector.shape_cast %81 : vector<1x128x128xf32> to vector<128x128xf32>
    %cst_91 = arith.constant dense<0.000000e+00> : vector<1x128xf32>
    %83 = tpu.matmul %80, %82, %cst_91 {dimension_numbers = #tpu.dot_dimension_numbers<[1], [0], [0], [1], [0, 0, 1, 1], [], []>} : vector<1x128xf32>, vector<128x128xf32>, vector<1x128xf32> -> vector<1x128xf32>
    %c1_92 = arith.constant 1 : index
    %c0_93 = arith.constant 0 : index
    %84 = vector.load %arg21[%c1_92, %c0_93] : memref<4x128xf32, #tpu.memory_space<vmem>>, vector<1x128xf32>
    %c1_94 = arith.constant 1 : index
    %c0_95 = arith.constant 0 : index
    %c0_96 = arith.constant 0 : index
    %85 = vector.load %arg13[%c1_94, %c0_95, %c0_96] : memref<4x128x128xf32, #tpu.memory_space<vmem>>, vector<1x128x128xf32>
    %86 = vector.shape_cast %85 : vector<1x128x128xf32> to vector<128x128xf32>
    %cst_97 = arith.constant dense<0.000000e+00> : vector<1x128xf32>
    %87 = tpu.matmul %84, %86, %cst_97 {dimension_numbers = #tpu.dot_dimension_numbers<[1], [0], [0], [1], [0, 0, 1, 1], [], []>} : vector<1x128xf32>, vector<128x128xf32>, vector<1x128xf32> -> vector<1x128xf32>
    %88 = arith.addf %83, %87 : vector<1x128xf32>
    %c2_98 = arith.constant 2 : index
    %c0_99 = arith.constant 0 : index
    %89 = vector.load %arg21[%c2_98, %c0_99] : memref<4x128xf32, #tpu.memory_space<vmem>>, vector<1x128xf32>
    %c2_100 = arith.constant 2 : index
    %c0_101 = arith.constant 0 : index
    %c0_102 = arith.constant 0 : index
    %90 = vector.load %arg13[%c2_100, %c0_101, %c0_102] : memref<4x128x128xf32, #tpu.memory_space<vmem>>, vector<1x128x128xf32>
    %91 = vector.shape_cast %90 : vector<1x128x128xf32> to vector<128x128xf32>
    %cst_103 = arith.constant dense<0.000000e+00> : vector<1x128xf32>
    %92 = tpu.matmul %89, %91, %cst_103 {dimension_numbers = #tpu.dot_dimension_numbers<[1], [0], [0], [1], [0, 0, 1, 1], [], []>} : vector<1x128xf32>, vector<128x128xf32>, vector<1x128xf32> -> vector<1x128xf32>
    %93 = arith.addf %88, %92 : vector<1x128xf32>
    %c3 = arith.constant 3 : index
    %c0_104 = arith.constant 0 : index
    %94 = vector.load %arg21[%c3, %c0_104] : memref<4x128xf32, #tpu.memory_space<vmem>>, vector<1x128xf32>
    %c3_105 = arith.constant 3 : index
    %c0_106 = arith.constant 0 : index
    %c0_107 = arith.constant 0 : index
    %95 = vector.load %arg13[%c3_105, %c0_106, %c0_107] : memref<4x128x128xf32, #tpu.memory_space<vmem>>, vector<1x128x128xf32>
    %96 = vector.shape_cast %95 : vector<1x128x128xf32> to vector<128x128xf32>
    %cst_108 = arith.constant dense<0.000000e+00> : vector<1x128xf32>
    %97 = tpu.matmul %94, %96, %cst_108 {dimension_numbers = #tpu.dot_dimension_numbers<[1], [0], [0], [1], [0, 0, 1, 1], [], []>} : vector<1x128xf32>, vector<128x128xf32>, vector<1x128xf32> -> vector<1x128xf32>
    %98 = arith.addf %93, %97 : vector<1x128xf32>
    %c0_109 = arith.constant 0 : index
    %c0_110 = arith.constant 0 : index
    %99 = vector.load %arg14[%c0_109, %c0_110] : memref<1x128xf32, #tpu.memory_space<vmem>>, vector<1x128xf32>
    %100 = arith.addf %98, %99 : vector<1x128xf32>
    %cst_111 = arith.constant 0.000000e+00 : f32
    %101 = vector.broadcast %cst_111 : f32 to vector<1x128xf32>
    %102 = arith.maximumf %100, %101 : vector<1x128xf32>
    %c0_112 = arith.constant 0 : index
    %c0_113 = arith.constant 0 : index
    %103 = vector.load %arg15[%c0_112, %c0_113] : memref<128x7xf32, #tpu.memory_space<vmem>>, vector<128x7xf32>
    %cst_114 = arith.constant dense<0.000000e+00> : vector<1x7xf32>
    %104 = tpu.matmul %102, %103, %cst_114 {dimension_numbers = #tpu.dot_dimension_numbers<[1], [0], [0], [1], [0, 0, 1, 1], [], []>} : vector<1x128xf32>, vector<128x7xf32>, vector<1x7xf32> -> vector<1x7xf32>
    %c0_115 = arith.constant 0 : index
    %c0_116 = arith.constant 0 : index
    %105 = vector.load %arg16[%c0_115, %c0_116] : memref<1x7xf32, #tpu.memory_space<vmem>>, vector<1x7xf32>
    %106 = arith.addf %104, %105 : vector<1x7xf32>
    %107 = vector.extract_strided_slice %106 {offsets = [0, 0], sizes = [1, 1], strides = [1, 1]} : vector<1x7xf32> to vector<1x1xf32>
    %108 = vector.extract_strided_slice %106 {offsets = [0, 1], sizes = [1, 6], strides = [1, 1]} : vector<1x7xf32> to vector<1x6xf32>
    %cst_117 = arith.constant dense<0.000000e+00> : vector<1xf32>
    %109 = vector.multi_reduction <add>, %108, %cst_117 [1] : vector<1x6xf32> to vector<1xf32>
    %110 = vector.shape_cast %109 : vector<1xf32> to vector<1x1xf32>
    %cst_118 = arith.constant 6.000000e+00 : f32
    %111 = vector.broadcast %cst_118 : f32 to vector<1x1xf32>
    %112 = arith.divf %110, %111 : vector<1x1xf32>
    %113 = vector.broadcast %112 : vector<1x1xf32> to vector<1x6xf32>
    %114 = arith.subf %108, %113 : vector<1x6xf32>
    %115 = vector.broadcast %107 : vector<1x1xf32> to vector<1x6xf32>
    %116 = arith.addf %115, %114 : vector<1x6xf32>
    %c0_119 = arith.constant 0 : index
    %c0_120 = arith.constant 0 : index
    %c0_121 = arith.constant 0 : index
    %117 = vector.load %arg17[%c0_119, %c0_120, %c0_121] : memref<1x1x6xf32, #tpu.memory_space<vmem>>, vector<1x1x6xf32>
    %118 = vector.shape_cast %117 : vector<1x1x6xf32> to vector<1x6xf32>
    %119 = vector.shape_cast %116 : vector<1x6xf32> to vector<1x1x6xf32>
    tpu.vector_store %arg17[%c0_119, %c0_120, %c0_121], %119 {strides = array<i32>} : memref<1x1x6xf32, #tpu.memory_space<vmem>>, vector<1x1x6xf32>,
    return
  }
  func.func @transform_0(%arg0: i32) -> (i32, i32, i32) {
    %c0_i32 = arith.constant 0 : i32
    %c0_i32_0 = arith.constant 0 : i32
    %c0_i32_1 = arith.constant 0 : i32
    return %arg0, %c0_i32, %c0_i32_0 : i32, i32, i32
  }
  func.func @transform_1(%arg0: i32) -> (i32, i32) {
    %c0_i32 = arith.constant 0 : i32
    %c0_i32_0 = arith.constant 0 : i32
    %c0_i32_1 = arith.constant 0 : i32
    return %c0_i32, %c0_i32_0 : i32, i32
  }
  func.func @transform_2(%arg0: i32) -> (i32, i32) {
    %c0_i32 = arith.constant 0 : i32
    %c0_i32_0 = arith.constant 0 : i32
    %c0_i32_1 = arith.constant 0 : i32
    return %c0_i32, %c0_i32_0 : i32, i32
  }
  func.func @transform_3(%arg0: i32) -> (i32, i32) {
    %c0_i32 = arith.constant 0 : i32
    %c0_i32_0 = arith.constant 0 : i32
    %c0_i32_1 = arith.constant 0 : i32
    return %c0_i32, %c0_i32_0 : i32, i32
  }
  func.func @transform_4(%arg0: i32) -> (i32, i32) {
    %c0_i32 = arith.constant 0 : i32
    %c0_i32_0 = arith.constant 0 : i32
    %c0_i32_1 = arith.constant 0 : i32
    return %c0_i32, %c0_i32_0 : i32, i32
  }
  func.func @transform_5(%arg0: i32) -> (i32, i32) {
    %c0_i32 = arith.constant 0 : i32
    %c0_i32_0 = arith.constant 0 : i32
    %c0_i32_1 = arith.constant 0 : i32
    return %c0_i32, %c0_i32_0 : i32, i32
  }
  func.func @transform_6(%arg0: i32) -> (i32, i32) {
    %c0_i32 = arith.constant 0 : i32
    %c0_i32_0 = arith.constant 0 : i32
    %c0_i32_1 = arith.constant 0 : i32
    return %c0_i32, %c0_i32_0 : i32, i32
  }
  func.func @transform_7(%arg0: i32) -> (i32, i32) {
    %c0_i32 = arith.constant 0 : i32
    %c0_i32_0 = arith.constant 0 : i32
    %c0_i32_1 = arith.constant 0 : i32
    return %c0_i32, %c0_i32_0 : i32, i32
  }
  func.func @transform_8(%arg0: i32) -> (i32, i32, i32) {
    %c0_i32 = arith.constant 0 : i32
    %c0_i32_0 = arith.constant 0 : i32
    %c0_i32_1 = arith.constant 0 : i32
    %c0_i32_2 = arith.constant 0 : i32
    return %c0_i32, %c0_i32_0, %c0_i32_1 : i32, i32, i32
  }
  func.func @transform_9(%arg0: i32) -> (i32, i32) {
    %c0_i32 = arith.constant 0 : i32
    %c0_i32_0 = arith.constant 0 : i32
    %c0_i32_1 = arith.constant 0 : i32
    return %c0_i32, %c0_i32_0 : i32, i32
  }
  func.func @transform_10(%arg0: i32) -> (i32, i32, i32) {
    %c0_i32 = arith.constant 0 : i32
    %c0_i32_0 = arith.constant 0 : i32
    %c0_i32_1 = arith.constant 0 : i32
    %c0_i32_2 = arith.constant 0 : i32
    return %c0_i32, %c0_i32_0, %c0_i32_1 : i32, i32, i32
  }
  func.func @transform_11(%arg0: i32) -> (i32, i32) {
    %c0_i32 = arith.constant 0 : i32
    %c0_i32_0 = arith.constant 0 : i32
    %c0_i32_1 = arith.constant 0 : i32
    return %c0_i32, %c0_i32_0 : i32, i32
  }
  func.func @transform_12(%arg0: i32) -> (i32, i32, i32) {
    %c0_i32 = arith.constant 0 : i32
    %c0_i32_0 = arith.constant 0 : i32
    %c0_i32_1 = arith.constant 0 : i32
    %c0_i32_2 = arith.constant 0 : i32
    return %c0_i32, %c0_i32_0, %c0_i32_1 : i32, i32, i32
  }
  func.func @transform_13(%arg0: i32) -> (i32, i32) {
    %c0_i32 = arith.constant 0 : i32
    %c0_i32_0 = arith.constant 0 : i32
    %c0_i32_1 = arith.constant 0 : i32
    return %c0_i32, %c0_i32_0 : i32, i32
  }
  func.func @transform_14(%arg0: i32) -> (i32, i32) {
    %c0_i32 = arith.constant 0 : i32
    %c0_i32_0 = arith.constant 0 : i32
    %c0_i32_1 = arith.constant 0 : i32
    return %c0_i32, %c0_i32_0 : i32, i32
  }
  func.func @transform_15(%arg0: i32) -> (i32, i32) {
    %c0_i32 = arith.constant 0 : i32
    %c0_i32_0 = arith.constant 0 : i32
    %c0_i32_1 = arith.constant 0 : i32
    return %c0_i32, %c0_i32_0 : i32, i32
  }
  func.func @transform_16(%arg0: i32) -> (i32, i32, i32) {
    %c0_i32 = arith.constant 0 : i32
    %c0_i32_0 = arith.constant 0 : i32
    %c0_i32_1 = arith.constant 0 : i32
    return %arg0, %c0_i32, %c0_i32_0 : i32, i32, i32
  }
}

</mosaic_0001>

<llo_original>
// kernel: _lambda_.1
$region0: #{_lambda_.1}
  #allocation0 [shape = 'u32[]', space=smem, size = 0x4, offset = 0x4, fixed_abs, tag = 'smem constant byte address 0x4 - core index']
  #allocation1 [shape = 'u32[72,128]{1,0:T(1,128)}', space=vmem, size = 0x9000, scoped, tag = 'internal scratch']
  #allocation2 [shape = 'f32[9,512]{1,0:T(8,128)}', space=vmem, size = 0x8000, scoped, tag = 'scratch operand']
  #allocation3 [shape = 'f32[8,128]{1,0:T(8,128)}', space=vmem, size = 0x1000, scoped, tag = 'scratch operand']
  #allocation4 [shape = 'f32[6,128]{1,0:T(8,128)}', space=vmem, size = 0x1000, scoped, tag = 'scratch operand']
  #allocation5 [shape = 'f32[4,128]{1,0:T(4,128)}', space=vmem, size = 0x800, scoped, tag = 'scratch operand']
  %s0 = inlined_call_operand.vmem [shape: f32[2,9,512], index: 0, kind: input, shape index: {}]
  %s1 = inlined_call_operand.vmem [shape: f32[384,256], index: 1, kind: input, shape index: {}]
  %s2 = inlined_call_operand.hbm [shape: f32[256,256], index: 2, kind: input, shape index: {}]
  %s3 = inlined_call_operand.hbm [shape: f32[128,256], index: 3, kind: input, shape index: {}]
  %s4 = inlined_call_operand.vmem [shape: f32[1,256], index: 4, kind: input, shape index: {}]
  %s5 = inlined_call_operand.hbm [shape: f32[512,128], index: 5, kind: input, shape index: {}]
  %s6 = inlined_call_operand.vmem [shape: f32[256,128], index: 6, kind: input, shape index: {}]
  %s7 = inlined_call_operand.hbm [shape: f32[1,128], index: 7, kind: input, shape index: {}]
  %s8 = inlined_call_operand.hbm [shape: f32[3,128,128], index: 8, kind: input, shape index: {}]
  %s9 = inlined_call_operand.vmem [shape: f32[1,128], index: 9, kind: input, shape index: {}]
  %s10 = inlined_call_operand.hbm [shape: f32[3,128,128], index: 10, kind: input, shape index: {}]
  %s11 = inlined_call_operand.vmem [shape: f32[1,128], index: 11, kind: input, shape index: {}]
  %s12 = inlined_call_operand.hbm [shape: f32[4,128,128], index: 12, kind: input, shape index: {}]
  %s13 = inlined_call_operand.vmem [shape: f32[1,128], index: 13, kind: input, shape index: {}]
  %s14 = inlined_call_operand.vmem [shape: f32[128,7], index: 14, kind: input, shape index: {}]
  %s15 = inlined_call_operand.vmem [shape: f32[1,7], index: 15, kind: input, shape index: {}]
  %s16 = inlined_call_operand.hbm [shape: f32[2,1,6], index: 16, kind: output, shape index: {}]
  %s17 = sld [smem:[#allocation0]]
  $region125: #{_lambda_.1} parent=0
    _
  %s19 = ssub.s32 1, %s17
  %s20 = scalar_select 0, %s19, %s17
  $region1: #{_lambda_.1} parent=0
    #allocation6 [shape = 'u8[262144]{0}', space=vmem, size = 0x40000, scoped, tag = 'input window, operand 2, single buffered']
    #allocation7 [shape = 's32[2]{0}', space=sflag, size = 0x8, scoped, tag = 'scoped memory for _lambda_.1']
    #allocation8 [shape = 's32[2]{0}', space=sflag, size = 0x8, scoped, tag = 'scoped memory for _lambda_.1']
    #allocation9 [shape = 'u8[131072]{0}', space=vmem, size = 0x20000, scoped, tag = 'input window, operand 3, single buffered']
    #allocation10 [shape = 's32[1]{0}', space=sflag, size = 0x4, scoped, tag = 'scoped memory for _lambda_.1']
    #allocation11 [shape = 'u8[262144]{0}', space=vmem, size = 0x40000, scoped, tag = 'input window, operand 5, single buffered']
    #allocation12 [shape = 'u8[512]{0}', space=vmem, size = 0x400, scoped, tag = 'input window, operand 7, single buffered']
    #allocation13 [shape = 's32[1]{0}', space=sflag, size = 0x4, scoped, tag = 'scoped memory for _lambda_.1']
    #allocation14 [shape = 'u8[196608]{0}', space=vmem, size = 0x30000, scoped, tag = 'input window, operand 8, single buffered']
    #allocation15 [shape = 'u8[196608]{0}', space=vmem, size = 0x30000, scoped, tag = 'input window, operand 10, single buffered']
    #allocation16 [shape = 's32[1]{0}', space=sflag, size = 0x4, scoped, tag = 'scoped memory for _lambda_.1']
    #allocation17 [shape = 'u8[262144]{0}', space=vmem, size = 0x40000, scoped, tag = 'input window, operand 12, single buffered']
    #allocation18 [shape = 'u8[1024]{0}', space=vmem, size = 0x400, scoped, tag = 'output window, operand 0']
    %21 = vsyncpa [#allocation7], 0
    %22 = vsyncpa [#allocation10], 0
    %23 = vsyncpa [#allocation13], 0
    %24 = vsyncpa [#allocation16], 0
    %25 = vsyncpa [#allocation8], 0
    %s26 = scalar_lea.sflag [#allocation8], 1
    %27 = vsyncpa %s26, 0
    loop: start=0, step=1, limit=4
    $region2: #{_lambda_.1} parent=1 // loop_pre_header
      _
    $region3: #{_lambda_.1} parent=1 // loop_header
      %s29 = sphi 0, %s33
      %p30 = scmp.ge.s32.totalorder %s29, 4
      %s39 = sphi 0, %s41
      %s42 = sphi 0, %s39
      %s43 = sphi 0, %s42
      %s59 = sphi 0, %s43
      %s63 = sphi 0, %s63
      %s65 = sphi 0, %s63
      %s66 = sphi 0, %s65
      %s80 = sphi 0, %s66
      %s84 = sphi 0, %s84
      %s86 = sphi 0, %s84
      %s87 = sphi 0, %s86
      %s101 = sphi 0, %s87
      %s105 = sphi 0, %s105
      %s107 = sphi 0, %s105
      %s108 = sphi 0, %s107
      %s122 = sphi 0, %s108
      %s126 = sphi 0, %s126
      %s128 = sphi 0, %s126
      %s129 = sphi 0, %s128
      %s143 = sphi 0, %s129
      %s147 = sphi 0, %s147
      %s149 = sphi 0, %s147
      %s150 = sphi 0, %s149
      %s164 = sphi 0, %s150
      %s168 = sphi 0, %s168
      %s170 = sphi 0, %s168
      %s171 = sphi 0, %s170
      %s185 = sphi 0, %s171
      %s189 = sphi 0, %s189
      %s191 = sphi 0, %s189
      %s192 = sphi 0, %s191
      %s206 = sphi 0, %s192
      %s210 = sphi 0, %s210
      %s212 = sphi 0, %s210
      %s213 = sphi 0, %s212
      %s227 = sphi 0, %s213
      %s231 = sphi 0, %s231
      %s233 = sphi 0, %s231
      %s234 = sphi 0, %s233
      %s248 = sphi 0, %s234
      %s252 = sphi 0, %s252
      %s254 = sphi 0, %s252
      %s255 = sphi 0, %s254
      %s269 = sphi 0, %s255
      %s273 = sphi 0, %s273
      %s275 = sphi 0, %s273
      %s276 = sphi 0, %s275
      %s290 = sphi 0, %s276
      %s294 = sphi 0, %s294
      %s296 = sphi 0, %s294
      %s297 = sphi 0, %s296
      %s311 = sphi 0, %s297
      %s315 = sphi 0, %s315
      %s317 = sphi 0, %s315
      %s318 = sphi 0, %s317
      %s332 = sphi 0, %s318
      %s336 = sphi 0, %s336
      %s338 = sphi 0, %s336
      %s339 = sphi 0, %s338
      %s353 = sphi 0, %s339
      %s357 = sphi 0, %s357
      %s359 = sphi 0, %s357
      %s360 = sphi 0, %s359
      %s374 = sphi 0, %s360
      %s380 = sphi 0, %s382
      %s383 = sphi 0, %s380
      %s384 = sphi 0, %s383
      %s400 = sphi 0, %s384
    $region4: #{_lambda_.1} parent=1 // loop_header_branch
      %32 = sbr.rel (%p30) target = $region8
    $region5: #{_lambda_.1} parent=1 // loop_body
      %s34 = ssub.s32 %s29, 1
      %s35 = ssub.s32 %s29, 2
      %s36 = sadd.s32 %s29, 1
      %s37 = ssub.s32 %s29, %s36
      %p38 = scmp.eq.s32.totalorder %s37, 0
      %s40 = sadd.s32 %s39, 1
      %s41 = scalar_select %p38, %s39, %s40
      %p44 = pneg %p38
      %p45 = scmp.eq.s32.totalorder %s29, 1
      %p46 = por %p44, %p45
      %p47 = scmp.ne.s32.totalorder %s39, %s42
      %p48 = scmp.eq.s32.totalorder %s29, 0
      %p49 = por %p47, %p48
      %p50 = scmp.ne.s32.totalorder %s39, %s42
      %p51 = scmp.eq.s32.totalorder %s34, 1
      %p52 = por %p50, %p51
      %p53 = scmp.ne.s32.totalorder %s42, %s43
      %p54 = scmp.eq.s32.totalorder %s34, 0
      %p55 = por %p53, %p54
      %p56 = scmp.ne.s32.totalorder %s42, %s43
      %p57 = scmp.eq.s32.totalorder %s35, 1
      %p58 = por %p56, %p57
      %p60 = scmp.ne.s32.totalorder %s43, %s59
      %p61 = scmp.eq.s32.totalorder %s35, 0
      %p62 = por %p60, %p61
      %s64 = sadd.s32 %s63, 1
      %p67 = scmp.eq.s32.totalorder %s29, 1
      %p68 = scmp.ne.s32.totalorder %s63, %s65
      %p69 = scmp.eq.s32.totalorder %s29, 0
      %p70 = por %p68, %p69
      %p71 = scmp.ne.s32.totalorder %s63, %s65
      %p72 = scmp.eq.s32.totalorder %s34, 1
      %p73 = por %p71, %p72
      %p74 = scmp.ne.s32.totalorder %s65, %s66
      %p75 = scmp.eq.s32.totalorder %s34, 0
      %p76 = por %p74, %p75
      %p77 = scmp.ne.s32.totalorder %s65, %s66
      %p78 = scmp.eq.s32.totalorder %s35, 1
      %p79 = por %p77, %p78
      %p81 = scmp.ne.s32.totalorder %s66, %s80
      %p82 = scmp.eq.s32.totalorder %s35, 0
      %p83 = por %p81, %p82
      %s85 = sadd.s32 %s84, 1
      %p88 = scmp.eq.s32.totalorder %s29, 1
      %p89 = scmp.ne.s32.totalorder %s84, %s86
      %p90 = scmp.eq.s32.totalorder %s29, 0
      %p91 = por %p89, %p90
      %p92 = scmp.ne.s32.totalorder %s84, %s86
      %p93 = scmp.eq.s32.totalorder %s34, 1
      %p94 = por %p92, %p93
      %p95 = scmp.ne.s32.totalorder %s86, %s87
      %p96 = scmp.eq.s32.totalorder %s34, 0
      %p97 = por %p95, %p96
      %p98 = scmp.ne.s32.totalorder %s86, %s87
      %p99 = scmp.eq.s32.totalorder %s35, 1
      %p100 = por %p98, %p99
      %p102 = scmp.ne.s32.totalorder %s87, %s101
      %p103 = scmp.eq.s32.totalorder %s35, 0
      %p104 = por %p102, %p103
      %s106 = sadd.s32 %s105, 1
      %p109 = scmp.eq.s32.totalorder %s29, 1
      %p110 = scmp.ne.s32.totalorder %s105, %s107
      %p111 = scmp.eq.s32.totalorder %s29, 0
      %p112 = por %p110, %p111
      %p113 = scmp.ne.s32.totalorder %s105, %s107
      %p114 = scmp.eq.s32.totalorder %s34, 1
      %p115 = por %p113, %p114
      %p116 = scmp.ne.s32.totalorder %s107, %s108
      %p117 = scmp.eq.s32.totalorder %s34, 0
      %p118 = por %p116, %p117
      %p119 = scmp.ne.s32.totalorder %s107, %s108
      %p120 = scmp.eq.s32.totalorder %s35, 1
      %p121 = por %p119, %p120
      %p123 = scmp.ne.s32.totalorder %s108, %s122
      %p124 = scmp.eq.s32.totalorder %s35, 0
      %p125 = por %p123, %p124
      %s127 = sadd.s32 %s126, 1
      %p130 = scmp.eq.s32.totalorder %s29, 1
      %p131 = scmp.ne.s32.totalorder %s126, %s128
      %p132 = scmp.eq.s32.totalorder %s29, 0
      %p133 = por %p131, %p132
      %p134 = scmp.ne.s32.totalorder %s126, %s128
      %p135 = scmp.eq.s32.totalorder %s34, 1
      %p136 = por %p134, %p135
      %p137 = scmp.ne.s32.totalorder %s128, %s129
      %p138 = scmp.eq.s32.totalorder %s34, 0
      %p139 = por %p137, %p138
      %p140 = scmp.ne.s32.totalorder %s128, %s129
      %p141 = scmp.eq.s32.totalorder %s35, 1
      %p142 = por %p140, %p141
      %p144 = scmp.ne.s32.totalorder %s129, %s143
      %p145 = scmp.eq.s32.totalorder %s35, 0
      %p146 = por %p144, %p145
      %s148 = sadd.s32 %s147, 1
      %p151 = scmp.eq.s32.totalorder %s29, 1
      %p152 = scmp.ne.s32.totalorder %s147, %s149
      %p153 = scmp.eq.s32.totalorder %s29, 0
      %p154 = por %p152, %p153
      %p155 = scmp.ne.s32.totalorder %s147, %s149
      %p156 = scmp.eq.s32.totalorder %s34, 1
      %p157 = por %p155, %p156
      %p158 = scmp.ne.s32.totalorder %s149, %s150
      %p159 = scmp.eq.s32.totalorder %s34, 0
      %p160 = por %p158, %p159
      %p161 = scmp.ne.s32.totalorder %s149, %s150
      %p162 = scmp.eq.s32.totalorder %s35, 1
      %p163 = por %p161, %p162
      %p165 = scmp.ne.s32.totalorder %s150, %s164
      %p166 = scmp.eq.s32.totalorder %s35, 0
      %p167 = por %p165, %p166
      %s169 = sadd.s32 %s168, 1
      %p172 = scmp.eq.s32.totalorder %s29, 1
      %p173 = scmp.ne.s32.totalorder %s168, %s170
      %p174 = scmp.eq.s32.totalorder %s29, 0
      %p175 = por %p173, %p174
      %p176 = scmp.ne.s32.totalorder %s168, %s170
      %p177 = scmp.eq.s32.totalorder %s34, 1
      %p178 = por %p176, %p177
      %p179 = scmp.ne.s32.totalorder %s170, %s171
      %p180 = scmp.eq.s32.totalorder %s34, 0
      %p181 = por %p179, %p180
      %p182 = scmp.ne.s32.totalorder %s170, %s171
      %p183 = scmp.eq.s32.totalorder %s35, 1
      %p184 = por %p182, %p183
      %p186 = scmp.ne.s32.totalorder %s171, %s185
      %p187 = scmp.eq.s32.totalorder %s35, 0
      %p188 = por %p186, %p187
      %s190 = sadd.s32 %s189, 1
      %p193 = scmp.eq.s32.totalorder %s29, 1
      %p194 = scmp.ne.s32.totalorder %s189, %s191
      %p195 = scmp.eq.s32.totalorder %s29, 0
      %p196 = por %p194, %p195
      %p197 = scmp.ne.s32.totalorder %s189, %s191
      %p198 = scmp.eq.s32.totalorder %s34, 1
      %p199 = por %p197, %p198
      %p200 = scmp.ne.s32.totalorder %s191, %s192
      %p201 = scmp.eq.s32.totalorder %s34, 0
      %p202 = por %p200, %p201
      %p203 = scmp.ne.s32.totalorder %s191, %s192
      %p204 = scmp.eq.s32.totalorder %s35, 1
      %p205 = por %p203, %p204
      %p207 = scmp.ne.s32.totalorder %s192, %s206
      %p208 = scmp.eq.s32.totalorder %s35, 0
      %p209 = por %p207, %p208
      %s211 = sadd.s32 %s210, 1
      %p214 = scmp.eq.s32.totalorder %s29, 1
      %p215 = scmp.ne.s32.totalorder %s210, %s212
      %p216 = scmp.eq.s32.totalorder %s29, 0
      %p217 = por %p215, %p216
      %p218 = scmp.ne.s32.totalorder %s210, %s212
      %p219 = scmp.eq.s32.totalorder %s34, 1
      %p220 = por %p218, %p219
      %p221 = scmp.ne.s32.totalorder %s212, %s213
      %p222 = scmp.eq.s32.totalorder %s34, 0
      %p223 = por %p221, %p222
      %p224 = scmp.ne.s32.totalorder %s212, %s213
      %p225 = scmp.eq.s32.totalorder %s35, 1
      %p226 = por %p224, %p225
      %p228 = scmp.ne.s32.totalorder %s213, %s227
      %p229 = scmp.eq.s32.totalorder %s35, 0
      %p230 = por %p228, %p229
      %s232 = sadd.s32 %s231, 1
      %p235 = scmp.eq.s32.totalorder %s29, 1
      %p236 = scmp.ne.s32.totalorder %s231, %s233
      %p237 = scmp.eq.s32.totalorder %s29, 0
      %p238 = por %p236, %p237
      %p239 = scmp.ne.s32.totalorder %s231, %s233
      %p240 = scmp.eq.s32.totalorder %s34, 1
      %p241 = por %p239, %p240
      %p242 = scmp.ne.s32.totalorder %s233, %s234
      %p243 = scmp.eq.s32.totalorder %s34, 0
      %p244 = por %p242, %p243
      %p245 = scmp.ne.s32.totalorder %s233, %s234
      %p246 = scmp.eq.s32.totalorder %s35, 1
      %p247 = por %p245, %p246
      %p249 = scmp.ne.s32.totalorder %s234, %s248
      %p250 = scmp.eq.s32.totalorder %s35, 0
      %p251 = por %p249, %p250
      %s253 = sadd.s32 %s252, 1
      %p256 = scmp.eq.s32.totalorder %s29, 1
      %p257 = scmp.ne.s32.totalorder %s252, %s254
      %p258 = scmp.eq.s32.totalorder %s29, 0
      %p259 = por %p257, %p258
      %p260 = scmp.ne.s32.totalorder %s252, %s254
      %p261 = scmp.eq.s32.totalorder %s34, 1
      %p262 = por %p260, %p261
      %p263 = scmp.ne.s32.totalorder %s254, %s255
      %p264 = scmp.eq.s32.totalorder %s34, 0
      %p265 = por %p263, %p264
      %p266 = scmp.ne.s32.totalorder %s254, %s255
      %p267 = scmp.eq.s32.totalorder %s35, 1
      %p268 = por %p266, %p267
      %p270 = scmp.ne.s32.totalorder %s255, %s269
      %p271 = scmp.eq.s32.totalorder %s35, 0
      %p272 = por %p270, %p271
      %s274 = sadd.s32 %s273, 1
      %p277 = scmp.eq.s32.totalorder %s29, 1
      %p278 = scmp.ne.s32.totalorder %s273, %s275
      %p279 = scmp.eq.s32.totalorder %s29, 0
      %p280 = por %p278, %p279
      %p281 = scmp.ne.s32.totalorder %s273, %s275
      %p282 = scmp.eq.s32.totalorder %s34, 1
      %p283 = por %p281, %p282
      %p284 = scmp.ne.s32.totalorder %s275, %s276
      %p285 = scmp.eq.s32.totalorder %s34, 0
      %p286 = por %p284, %p285
      %p287 = scmp.ne.s32.totalorder %s275, %s276
      %p288 = scmp.eq.s32.totalorder %s35, 1
      %p289 = por %p287, %p288
      %p291 = scmp.ne.s32.totalorder %s276, %s290
      %p292 = scmp.eq.s32.totalorder %s35, 0
      %p293 = por %p291, %p292
      %s295 = sadd.s32 %s294, 1
      %p298 = scmp.eq.s32.totalorder %s29, 1
      %p299 = scmp.ne.s32.totalorder %s294, %s296
      %p300 = scmp.eq.s32.totalorder %s29, 0
      %p301 = por %p299, %p300
      %p302 = scmp.ne.s32.totalorder %s294, %s296
      %p303 = scmp.eq.s32.totalorder %s34, 1
      %p304 = por %p302, %p303
      %p305 = scmp.ne.s32.totalorder %s296, %s297
      %p306 = scmp.eq.s32.totalorder %s34, 0
      %p307 = por %p305, %p306
      %p308 = scmp.ne.s32.totalorder %s296, %s297
      %p309 = scmp.eq.s32.totalorder %s35, 1
      %p310 = por %p308, %p309
      %p312 = scmp.ne.s32.totalorder %s297, %s311
      %p313 = scmp.eq.s32.totalorder %s35, 0
      %p314 = por %p312, %p313
      %s316 = sadd.s32 %s315, 1
      %p319 = scmp.eq.s32.totalorder %s29, 1
      %p320 = scmp.ne.s32.totalorder %s315, %s317
      %p321 = scmp.eq.s32.totalorder %s29, 0
      %p322 = por %p320, %p321
      %p323 = scmp.ne.s32.totalorder %s315, %s317
      %p324 = scmp.eq.s32.totalorder %s34, 1
      %p325 = por %p323, %p324
      %p326 = scmp.ne.s32.totalorder %s317, %s318
      %p327 = scmp.eq.s32.totalorder %s34, 0
      %p328 = por %p326, %p327
      %p329 = scmp.ne.s32.totalorder %s317, %s318
      %p330 = scmp.eq.s32.totalorder %s35, 1
      %p331 = por %p329, %p330
      %p333 = scmp.ne.s32.totalorder %s318, %s332
      %p334 = scmp.eq.s32.totalorder %s35, 0
      %p335 = por %p333, %p334
      %s337 = sadd.s32 %s336, 1
      %p340 = scmp.eq.s32.totalorder %s29, 1
      %p341 = scmp.ne.s32.totalorder %s336, %s338
      %p342 = scmp.eq.s32.totalorder %s29, 0
      %p343 = por %p341, %p342
      %p344 = scmp.ne.s32.totalorder %s336, %s338
      %p345 = scmp.eq.s32.totalorder %s34, 1
      %p346 = por %p344, %p345
      %p347 = scmp.ne.s32.totalorder %s338, %s339
      %p348 = scmp.eq.s32.totalorder %s34, 0
      %p349 = por %p347, %p348
      %p350 = scmp.ne.s32.totalorder %s338, %s339
      %p351 = scmp.eq.s32.totalorder %s35, 1
      %p352 = por %p350, %p351
      %p354 = scmp.ne.s32.totalorder %s339, %s353
      %p355 = scmp.eq.s32.totalorder %s35, 0
      %p356 = por %p354, %p355
      %s358 = sadd.s32 %s357, 1
      %p361 = scmp.eq.s32.totalorder %s29, 1
      %p362 = scmp.ne.s32.totalorder %s357, %s359
      %p363 = scmp.eq.s32.totalorder %s29, 0
      %p364 = por %p362, %p363
      %p365 = scmp.ne.s32.totalorder %s357, %s359
      %p366 = scmp.eq.s32.totalorder %s34, 1
      %p367 = por %p365, %p366
      %p368 = scmp.ne.s32.totalorder %s359, %s360
      %p369 = scmp.eq.s32.totalorder %s34, 0
      %p370 = por %p368, %p369
      %p371 = scmp.ne.s32.totalorder %s359, %s360
      %p372 = scmp.eq.s32.totalorder %s35, 1
      %p373 = por %p371, %p372
      %p375 = scmp.ne.s32.totalorder %s360, %s374
      %p376 = scmp.eq.s32.totalorder %s35, 0
      %p377 = por %p375, %p376
      %s378 = ssub.s32 %s29, %s36
      %p379 = scmp.eq.s32.totalorder %s378, 0
      %s381 = sadd.s32 %s380, 1
      %s382 = scalar_select %p379, %s380, %s381
      %p385 = pneg %p379
      %p386 = scmp.eq.s32.totalorder %s29, 1
      %p387 = por %p385, %p386
      %p388 = scmp.ne.s32.totalorder %s380, %s383
      %p389 = scmp.eq.s32.totalorder %s29, 0
      %p390 = por %p388, %p389
      %p391 = scmp.ne.s32.totalorder %s380, %s383
      %p392 = scmp.eq.s32.totalorder %s34, 1
      %p393 = por %p391, %p392
      %p394 = scmp.ne.s32.totalorder %s383, %s384
      %p395 = scmp.eq.s32.totalorder %s34, 0
      %p396 = por %p394, %p395
      %p397 = scmp.ne.s32.totalorder %s383, %s384
      %p398 = scmp.eq.s32.totalorder %s35, 1
      %p399 = por %p397, %p398
      %p401 = scmp.ne.s32.totalorder %s384, %s400
      %p402 = scmp.eq.s32.totalorder %s35, 0
      %p403 = por %p401, %p402
      %p404 = scmp.le.s32.totalorder 1, %s29
      %p405 = scmp.lt.s32.totalorder %s29, 3
      %p406 = pnand %p404, %p405
      %p407 = pneg %p406
      // Predicated region
      $region9: #{_lambda_.1} parent=5 // pred_check
        _
      $region10: #{_lambda_.1} parent=5 // pred_check_branch
        %409 = sbr.rel (%p406) target = $region12
      $region11: #{_lambda_.1} parent=5 // pred_region
        %s410 = ssub.s32 %s29, 1
        // Predicated region
        $region13: #{_lambda_.1} parent=11 // pred_check
          %p411 = pneg %p76
        $region14: #{_lambda_.1} parent=11 // pred_check_branch
          %413 = sbr.rel (%p411) target = $region16
        $region15: #{_lambda_.1} parent=11 // pred_region
          _
        $region16: #{_lambda_.1} parent=11 // pred_fallthru
          _
        // Predicated region
        $region17: #{_lambda_.1} parent=11 // pred_check
          %p414 = pneg %p97
        $region18: #{_lambda_.1} parent=11 // pred_check_branch
          %416 = sbr.rel (%p414) target = $region20
        $region19: #{_lambda_.1} parent=11 // pred_region
          %418 = vsyncadd [#allocation7], 0
          %s419 = sshll.u32 %s2, 4
          %s420 = int_to_ptr.hbm [resolvable:$true] %s419
          %s421 = sshll.u32 [#allocation6], 4
          %s422 = int_to_ptr.vmem [resolvable:$true] %s421
          %427 = dma.hbm_to_vmem [thread:$0]  %s420, 8192, %s422, [#allocation7], 256, 256, 16
        $region20: #{_lambda_.1} parent=11 // pred_fallthru
          _
        // Predicated region
        $region21: #{_lambda_.1} parent=11 // pred_check
          %p428 = pneg %p118
        $region22: #{_lambda_.1} parent=11 // pred_check_branch
          %430 = sbr.rel (%p428) target = $region24
        $region23: #{_lambda_.1} parent=11 // pred_region
          %432 = vsyncadd [#allocation10], 0
          %s433 = sshll.u32 %s3, 4
          %s434 = int_to_ptr.hbm [resolvable:$true] %s433
          %s435 = sshll.u32 [#allocation9], 4
          %s436 = int_to_ptr.vmem [resolvable:$true] %s435
          %441 = dma.hbm_to_vmem [thread:$0]  %s434, 4096, %s436, [#allocation10], 256, 256, 16
        $region24: #{_lambda_.1} parent=11 // pred_fallthru
          _
        // Predicated region
        $region25: #{_lambda_.1} parent=11 // pred_check
          %p442 = pneg %p139
        $region26: #{_lambda_.1} parent=11 // pred_check_branch
          %444 = sbr.rel (%p442) target = $region28
        $region27: #{_lambda_.1} parent=11 // pred_region
          _
        $region28: #{_lambda_.1} parent=11 // pred_fallthru
          _
        // Predicated region
        $region29: #{_lambda_.1} parent=11 // pred_check
          %p445 = pneg %p160
        $region30: #{_lambda_.1} parent=11 // pred_check_branch
          %447 = sbr.rel (%p445) target = $region32
        $region31: #{_lambda_.1} parent=11 // pred_region
          %449 = vsyncadd [#allocation10], 0
          %s450 = sshll.u32 %s5, 4
          %s451 = int_to_ptr.hbm [resolvable:$true] %s450
          %s452 = sshll.u32 [#allocation11], 4
          %s453 = int_to_ptr.vmem [resolvable:$true] %s452
          %458 = dma.hbm_to_vmem [thread:$0]  %s451, 8192, %s453, [#allocation10], 128, 128, 8
        $region32: #{_lambda_.1} parent=11 // pred_fallthru
          _
        // Predicated region
        $region33: #{_lambda_.1} parent=11 // pred_check
          %p459 = pneg %p181
        $region34: #{_lambda_.1} parent=11 // pred_check_branch
          %461 = sbr.rel (%p459) target = $region36
        $region35: #{_lambda_.1} parent=11 // pred_region
          _
        $region36: #{_lambda_.1} parent=11 // pred_fallthru
          _
        // Predicated region
        $region37: #{_lambda_.1} parent=11 // pred_check
          %p462 = pneg %p202
        $region38: #{_lambda_.1} parent=11 // pred_check_branch
          %464 = sbr.rel (%p462) target = $region40
        $region39: #{_lambda_.1} parent=11 // pred_region
          %466 = vsyncadd [#allocation13], 0
          %s468 = sshll.u32 %s7, 4
          %s469 = int_to_ptr.hbm [resolvable:$true] %s468
          %s470 = sshll.u32 [#allocation12], 4
          %s471 = int_to_ptr.vmem [resolvable:$true] %s470
          %473 = dma.hbm_to_vmem [thread:$0]  %s469, 16, %s471, [#allocation13]
        $region40: #{_lambda_.1} parent=11 // pred_fallthru
          _
        // Predicated region
        $region41: #{_lambda_.1} parent=11 // pred_check
          %p474 = pneg %p223
        $region42: #{_lambda_.1} parent=11 // pred_check_branch
          %476 = sbr.rel (%p474) target = $region44
        $region43: #{_lambda_.1} parent=11 // pred_region
          %478 = vsyncadd [#allocation13], 0
          %s479 = sshll.u32 %s8, 4
          %s480 = int_to_ptr.hbm [resolvable:$true] %s479
          %s481 = sshll.u32 [#allocation14], 4
          %s482 = int_to_ptr.vmem [resolvable:$true] %s481
          %487 = dma.hbm_to_vmem [thread:$0]  %s480, 6144, %s482, [#allocation13], 128, 128, 8
        $region44: #{_lambda_.1} parent=11 // pred_fallthru
          _
        // Predicated region
        $region45: #{_lambda_.1} parent=11 // pred_check
          %p488 = pneg %p244
        $region46: #{_lambda_.1} parent=11 // pred_check_branch
          %490 = sbr.rel (%p488) target = $region48
        $region47: #{_lambda_.1} parent=11 // pred_region
          _
        $region48: #{_lambda_.1} parent=11 // pred_fallthru
          _
        // Predicated region
        $region49: #{_lambda_.1} parent=11 // pred_check
          %p491 = pneg %p265
        $region50: #{_lambda_.1} parent=11 // pred_check_branch
          %493 = sbr.rel (%p491) target = $region52
        $region51: #{_lambda_.1} parent=11 // pred_region
          %495 = vsyncadd [#allocation16], 0
          %s496 = sshll.u32 %s10, 4
          %s497 = int_to_ptr.hbm [resolvable:$true] %s496
          %s498 = sshll.u32 [#allocation15], 4
          %s499 = int_to_ptr.vmem [resolvable:$true] %s498
          %504 = dma.hbm_to_vmem [thread:$0]  %s497, 6144, %s499, [#allocation16], 128, 128, 8
        $region52: #{_lambda_.1} parent=11 // pred_fallthru
          _
        // Predicated region
        $region53: #{_lambda_.1} parent=11 // pred_check
          %p505 = pneg %p286
        $region54: #{_lambda_.1} parent=11 // pred_check_branch
          %507 = sbr.rel (%p505) target = $region56
        $region55: #{_lambda_.1} parent=11 // pred_region
          _
        $region56: #{_lambda_.1} parent=11 // pred_fallthru
          _
        // Predicated region
        $region57: #{_lambda_.1} parent=11 // pred_check
          %p508 = pneg %p307
        $region58: #{_lambda_.1} parent=11 // pred_check_branch
          %510 = sbr.rel (%p508) target = $region60
        $region59: #{_lambda_.1} parent=11 // pred_region
          %512 = vsyncadd [#allocation16], 0
          %s513 = sshll.u32 %s12, 4
          %s514 = int_to_ptr.hbm [resolvable:$true] %s513
          %s515 = sshll.u32 [#allocation17], 4
          %s516 = int_to_ptr.vmem [resolvable:$true] %s515
          %521 = dma.hbm_to_vmem [thread:$0]  %s514, 8192, %s516, [#allocation16], 128, 128, 8
        $region60: #{_lambda_.1} parent=11 // pred_fallthru
          _
        // Predicated region
        $region61: #{_lambda_.1} parent=11 // pred_check
          %p522 = pneg %p328
        $region62: #{_lambda_.1} parent=11 // pred_check_branch
          %524 = sbr.rel (%p522) target = $region64
        $region63: #{_lambda_.1} parent=11 // pred_region
          _
        $region64: #{_lambda_.1} parent=11 // pred_fallthru
          _
        // Predicated region
        $region65: #{_lambda_.1} parent=11 // pred_check
          %p525 = pneg %p349
        $region66: #{_lambda_.1} parent=11 // pred_check_branch
          %527 = sbr.rel (%p525) target = $region68
        $region67: #{_lambda_.1} parent=11 // pred_region
          _
        $region68: #{_lambda_.1} parent=11 // pred_fallthru
          _
        // Predicated region
        $region69: #{_lambda_.1} parent=11 // pred_check
          %p528 = pneg %p370
        $region70: #{_lambda_.1} parent=11 // pred_check_branch
          %530 = sbr.rel (%p528) target = $region72
        $region71: #{_lambda_.1} parent=11 // pred_region
          _
        $region72: #{_lambda_.1} parent=11 // pred_fallthru
          _
      $region12: #{_lambda_.1} parent=5 // pred_fallthru
        _
      %p531 = scmp.lt.s32.totalorder %s29, 2
      // Predicated region
      $region73: #{_lambda_.1} parent=5 // pred_check
        %p532 = pneg %p531
      $region74: #{_lambda_.1} parent=5 // pred_check_branch
        %534 = sbr.rel (%p532) target = $region76
      $region75: #{_lambda_.1} parent=5 // pred_region
        // Predicated region
        $region77: #{_lambda_.1} parent=75 // pred_check
          %p535 = pneg %p49
        $region78: #{_lambda_.1} parent=75 // pred_check_branch
          %537 = sbr.rel (%p535) target = $region80
        $region79: #{_lambda_.1} parent=75 // pred_region
          %p538 = scmp.lt.s32.totalorder %s29, 1
          %s539 = scalar_select %p538, %s29, 1
          %s540 = smul.addr %s539, 8
          %s541 = smul.addr %s540, 8
          %s542 = scalar_lea.vmem %s0, %s541
        $region80: #{_lambda_.1} parent=75 // pred_fallthru
          _
      $region76: #{_lambda_.1} parent=5 // pred_fallthru
        _
      %p543 = scmp.le.s32.totalorder 1, %s29
      %p544 = scmp.lt.s32.totalorder %s29, 3
      %p545 = pnand %p543, %p544
      %p546 = pneg %p545
      // Predicated region
      $region81: #{_lambda_.1} parent=5 // pred_check
        _
      $region82: #{_lambda_.1} parent=5 // pred_check_branch
        %548 = sbr.rel (%p545) target = $region84
      $region83: #{_lambda_.1} parent=5 // pred_region
        %s549 = ssub.s32 %s29, 1
        // Predicated region
        $region85: #{_lambda_.1} parent=83 // pred_check
          %p550 = pneg %p97
        $region86: #{_lambda_.1} parent=83 // pred_check_branch
          %552 = sbr.rel (%p550) target = $region88
        $region87: #{_lambda_.1} parent=83 // pred_region
          %554 = dma.done [#allocation7], 8192
        $region88: #{_lambda_.1} parent=83 // pred_fallthru
          _
        // Predicated region
        $region89: #{_lambda_.1} parent=83 // pred_check
          %p555 = pneg %p118
        $region90: #{_lambda_.1} parent=83 // pred_check_branch
          %557 = sbr.rel (%p555) target = $region92
        $region91: #{_lambda_.1} parent=83 // pred_region
          %559 = dma.done [#allocation10], 4096
        $region92: #{_lambda_.1} parent=83 // pred_fallthru
          _
        // Predicated region
        $region93: #{_lambda_.1} parent=83 // pred_check
          %p560 = pneg %p160
        $region94: #{_lambda_.1} parent=83 // pred_check_branch
          %562 = sbr.rel (%p560) target = $region96
        $region95: #{_lambda_.1} parent=83 // pred_region
          %564 = dma.done [#allocation10], 8192
        $region96: #{_lambda_.1} parent=83 // pred_fallthru
          _
        // Predicated region
        $region97: #{_lambda_.1} parent=83 // pred_check
          %p565 = pneg %p202
        $region98: #{_lambda_.1} parent=83 // pred_check_branch
          %567 = sbr.rel (%p565) target = $region100
        $region99: #{_lambda_.1} parent=83 // pred_region
          %569 = dma.done [#allocation13], 16
        $region100: #{_lambda_.1} parent=83 // pred_fallthru
          _
        // Predicated region
        $region101: #{_lambda_.1} parent=83 // pred_check
          %p570 = pneg %p223
        $region102: #{_lambda_.1} parent=83 // pred_check_branch
          %572 = sbr.rel (%p570) target = $region104
        $region103: #{_lambda_.1} parent=83 // pred_region
          %574 = dma.done [#allocation13], 6144
        $region104: #{_lambda_.1} parent=83 // pred_fallthru
          _
        // Predicated region
        $region105: #{_lambda_.1} parent=83 // pred_check
          %p575 = pneg %p265
        $region106: #{_lambda_.1} parent=83 // pred_check_branch
          %577 = sbr.rel (%p575) target = $region108
        $region107: #{_lambda_.1} parent=83 // pred_region
          %579 = dma.done [#allocation16], 6144
        $region108: #{_lambda_.1} parent=83 // pred_fallthru
          _
        // Predicated region
        $region109: #{_lambda_.1} parent=83 // pred_check
          %p580 = pneg %p307
        $region110: #{_lambda_.1} parent=83 // pred_check_branch
          %582 = sbr.rel (%p580) target = $region112
        $region111: #{_lambda_.1} parent=83 // pred_region
          %584 = dma.done [#allocation16], 8192
        $region112: #{_lambda_.1} parent=83 // pred_fallthru
          _
        %p585 = scmp.lt.s32.totalorder %s34, 1
        %s586 = scalar_select %p585, %s34, 1
        %s587 = smul.addr %s586, 8
        %s588 = smul.addr %s587, 8
        %s589 = scalar_lea.vmem %s0, %s588
        %p590 = pneg %p55
        %p591 = pneg %p52
        %p592 = pneg %p76
        %p593 = pneg %p73
        %p594 = pneg %p97
        %p595 = pneg %p94
        %p596 = pneg %p118
        %p597 = pneg %p115
        %p598 = pneg %p139
        %p599 = pneg %p136
        %p600 = pneg %p160
        %p601 = pneg %p157
        %p602 = pneg %p181
        %p603 = pneg %p178
        %p604 = pneg %p202
        %p605 = pneg %p199
        %p606 = pneg %p223
        %p607 = pneg %p220
        %p608 = pneg %p244
        %p609 = pneg %p241
        %p610 = pneg %p265
        %p611 = pneg %p262
        %p612 = pneg %p286
        %p613 = pneg %p283
        %p614 = pneg %p307
        %p615 = pneg %p304
        %p616 = pneg %p328
        %p617 = pneg %p325
        %p618 = pneg %p349
        %p619 = pneg %p346
        %p620 = pneg %p370
        %p621 = pneg %p367
        %p622 = pneg %p396
        %p623 = pneg %p393
        %s624 = sand.u32 %s383, 1
        %s625 = scalar_lea.sflag [#allocation8], %s624
        %s626 = sand.u32 %s383, 1
        %s627 = scalar_lea.vmem [#allocation18], %s626
        %p628 = scmp.lt.s32.totalorder %s34, 1
        %s629 = scalar_select %p628, %s34, 1
        %s630 = smul.addr %s629, 8
        %s631 = smul.addr %s630, 8
        %s632 = scalar_lea.vmem %s0, %s631
        %v633 = vld [vmem:[%s632] sm:$0xff]
        %v634 = vld [vmem:[%s632 + $0x8] sm:$0xff]
        %v635 = vld [vmem:[%s632 + $0x10] sm:$0xff]
        %v636 = vld [vmem:[%s632 + $0x20] sm:$0x1]
        %v637 = vld [vmem:[%s632 + $0x28] sm:$0x1]
        %v638 = vld [vmem:[%s632 + $0x30] sm:$0x1]
        %v639 = vld [vmem:[%s1] sm:$0xff]
        %v640 = vld [vmem:[%s1 + $0x8] sm:$0xff]
        %v641 = vld [vmem:[%s1 + $0x10] sm:$0xff]
        %v642 = vld [vmem:[%s1 + $0x18] sm:$0xff]
        %v643 = vld [vmem:[%s1 + $0x20] sm:$0xff]
        %v644 = vld [vmem:[%s1 + $0x28] sm:$0xff]
        %v645 = vld [vmem:[%s1 + $0x30] sm:$0xff]
        %v646 = vld [vmem:[%s1 + $0x38] sm:$0xff]
        %v647 = vld [vmem:[%s1 + $0x40] sm:$0xff]
        %v648 = vld [vmem:[%s1 + $0x48] sm:$0xff]
        %v649 = vld [vmem:[%s1 + $0x50] sm:$0xff]
        %v650 = vld [vmem:[%s1 + $0x58] sm:$0xff]
        %v651 = vld [vmem:[%s1 + $0x60] sm:$0xff]
        %v652 = vld [vmem:[%s1 + $0x68] sm:$0xff]
        %v653 = vld [vmem:[%s1 + $0x70] sm:$0xff]
        %v654 = vld [vmem:[%s1 + $0x78] sm:$0xff]
        %v655 = vld [vmem:[%s1 + $0x80] sm:$0xff]
        %v656 = vld [vmem:[%s1 + $0x88] sm:$0xff]
        %v657 = vld [vmem:[%s1 + $0x90] sm:$0xff]
        %v658 = vld [vmem:[%s1 + $0x98] sm:$0xff]
        %v659 = vld [vmem:[%s1 + $0xa0] sm:$0xff]
        %v660 = vld [vmem:[%s1 + $0xa8] sm:$0xff]
        %v661 = vld [vmem:[%s1 + $0xb0] sm:$0xff]
        %v662 = vld [vmem:[%s1 + $0xb8] sm:$0xff]
        %v663 = vld [vmem:[%s1 + $0xc0] sm:$0xff]
        %v664 = vld [vmem:[%s1 + $0xc8] sm:$0xff]
        %v665 = vld [vmem:[%s1 + $0xd0] sm:$0xff]
        %v666 = vld [vmem:[%s1 + $0xd8] sm:$0xff]
        %v667 = vld [vmem:[%s1 + $0xe0] sm:$0xff]
        %v668 = vld [vmem:[%s1 + $0xe8] sm:$0xff]
        %v669 = vld [vmem:[%s1 + $0xf0] sm:$0xff]
        %v670 = vld [vmem:[%s1 + $0xf8] sm:$0xff]
        %v671 = vld [vmem:[%s1 + $0x100] sm:$0xff]
        %v672 = vld [vmem:[%s1 + $0x108] sm:$0xff]
        %v673 = vld [vmem:[%s1 + $0x110] sm:$0xff]
        %v674 = vld [vmem:[%s1 + $0x118] sm:$0xff]
        %v675 = vld [vmem:[%s1 + $0x120] sm:$0xff]
        %v676 = vld [vmem:[%s1 + $0x128] sm:$0xff]
        %v677 = vld [vmem:[%s1 + $0x130] sm:$0xff]
        %v678 = vld [vmem:[%s1 + $0x138] sm:$0xff]
        %v679 = vld [vmem:[%s1 + $0x140] sm:$0xff]
        %v680 = vld [vmem:[%s1 + $0x148] sm:$0xff]
        %v681 = vld [vmem:[%s1 + $0x150] sm:$0xff]
        %v682 = vld [vmem:[%s1 + $0x158] sm:$0xff]
        %v683 = vld [vmem:[%s1 + $0x160] sm:$0xff]
        %v684 = vld [vmem:[%s1 + $0x168] sm:$0xff]
        %v685 = vld [vmem:[%s1 + $0x170] sm:$0xff]
        %v686 = vld [vmem:[%s1 + $0x178] sm:$0xff]
        %v687 = vld [vmem:[%s1 + $0x180] sm:$0xff]
        %v688 = vld [vmem:[%s1 + $0x188] sm:$0xff]
        %v689 = vld [vmem:[%s1 + $0x190] sm:$0xff]
        %v690 = vld [vmem:[%s1 + $0x198] sm:$0xff]
        %v691 = vld [vmem:[%s1 + $0x1a0] sm:$0xff]
        %v692 = vld [vmem:[%s1 + $0x1a8] sm:$0xff]
        %v693 = vld [vmem:[%s1 + $0x1b0] sm:$0xff]
        %v694 = vld [vmem:[%s1 + $0x1b8] sm:$0xff]
        %v695 = vld [vmem:[%s1 + $0x1c0] sm:$0xff]
        %v696 = vld [vmem:[%s1 + $0x1c8] sm:$0xff]
        %v697 = vld [vmem:[%s1 + $0x1d0] sm:$0xff]
        %v698 = vld [vmem:[%s1 + $0x1d8] sm:$0xff]
        %v699 = vld [vmem:[%s1 + $0x1e0] sm:$0xff]
        %v700 = vld [vmem:[%s1 + $0x1e8] sm:$0xff]
        %v701 = vld [vmem:[%s1 + $0x1f0] sm:$0xff]
        %v702 = vld [vmem:[%s1 + $0x1f8] sm:$0xff]
        %v703 = vld [vmem:[%s1 + $0x200] sm:$0xff]
        %v704 = vld [vmem:[%s1 + $0x208] sm:$0xff]
        %v705 = vld [vmem:[%s1 + $0x210] sm:$0xff]
        %v706 = vld [vmem:[%s1 + $0x218] sm:$0xff]
        %v707 = vld [vmem:[%s1 + $0x220] sm:$0xff]
        %v708 = vld [vmem:[%s1 + $0x228] sm:$0xff]
        %v709 = vld [vmem:[%s1 + $0x230] sm:$0xff]
        %v710 = vld [vmem:[%s1 + $0x238] sm:$0xff]
        %v711 = vld [vmem:[%s1 + $0x240] sm:$0xff]
        %v712 = vld [vmem:[%s1 + $0x248] sm:$0xff]
        %v713 = vld [vmem:[%s1 + $0x250] sm:$0xff]
        %v714 = vld [vmem:[%s1 + $0x258] sm:$0xff]
        %v715 = vld [vmem:[%s1 + $0x260] sm:$0xff]
        %v716 = vld [vmem:[%s1 + $0x268] sm:$0xff]
        %v717 = vld [vmem:[%s1 + $0x270] sm:$0xff]
        %v718 = vld [vmem:[%s1 + $0x278] sm:$0xff]
        %v719 = vld [vmem:[%s1 + $0x280] sm:$0xff]
        %v720 = vld [vmem:[%s1 + $0x288] sm:$0xff]
        %v721 = vld [vmem:[%s1 + $0x290] sm:$0xff]
        %v722 = vld [vmem:[%s1 + $0x298] sm:$0xff]
        %v723 = vld [vmem:[%s1 + $0x2a0] sm:$0xff]
        %v724 = vld [vmem:[%s1 + $0x2a8] sm:$0xff]
        %v725 = vld [vmem:[%s1 + $0x2b0] sm:$0xff]
        %v726 = vld [vmem:[%s1 + $0x2b8] sm:$0xff]
        %v727 = vld [vmem:[%s1 + $0x2c0] sm:$0xff]
        %v728 = vld [vmem:[%s1 + $0x2c8] sm:$0xff]
        %v729 = vld [vmem:[%s1 + $0x2d0] sm:$0xff]
        %v730 = vld [vmem:[%s1 + $0x2d8] sm:$0xff]
        %v731 = vld [vmem:[%s1 + $0x2e0] sm:$0xff]
        %v732 = vld [vmem:[%s1 + $0x2e8] sm:$0xff]
        %v733 = vld [vmem:[%s1 + $0x2f0] sm:$0xff]
        %v734 = vld [vmem:[%s1 + $0x2f8] sm:$0xff]
        %v735 = vld [vmem:[%s4] sm:$0x3]
        %v737 = vperm.slane %v735, 0
        %v738 = vperm.slane %v735, 1
        %741 = vmatpush.msra.mxu0 %v669
        %742 = vmatpush.msra.mxu0 %v667
        %743 = vmatpush.msra.mxu0 %v665
        %744 = vmatpush.msra.mxu0 %v663
        %745 = vmatpush.msra.mxu0 %v661
        %746 = vmatpush.msra.mxu0 %v659
        %747 = vmatpush.msra.mxu0 %v657
        %748 = vmatpush.msra.mxu0 %v655
        %749 = vmatpush.msra.mxu0 %v653
        %750 = vmatpush.msra.mxu0 %v651
        %751 = vmatpush.msra.mxu0 %v649
        %752 = vmatpush.msra.mxu0 %v647
        %753 = vmatpush.msra.mxu0 %v645
        %754 = vmatpush.msra.mxu0 %v643
        %755 = vmatpush.msra.mxu0 %v641
        %756 = vmatpush.msra.mxu0 %v639
        %757 = vmatmul.f32.gmra.mxu0 %v633
        %v758 = vpop.f32.mrf.mxu0
        %v759 = vadd.f32 %v737, %v758
        %760 = vmatmul.f32.gmra.mxu0 %v636
        %v761 = vpop.f32.mrf.mxu0
        %v762 = vadd.f32 %v737, %v761
        %763 = vdwg.mxu0
        %764 = vmatpush.msra.mxu0 %v701
        %765 = vmatpush.msra.mxu0 %v699
        %766 = vmatpush.msra.mxu0 %v697
        %767 = vmatpush.msra.mxu0 %v695
        %768 = vmatpush.msra.mxu0 %v693
        %769 = vmatpush.msra.mxu0 %v691
        %770 = vmatpush.msra.mxu0 %v689
        %771 = vmatpush.msra.mxu0 %v687
        %772 = vmatpush.msra.mxu0 %v685
        %773 = vmatpush.msra.mxu0 %v683
        %774 = vmatpush.msra.mxu0 %v681
        %775 = vmatpush.msra.mxu0 %v679
        %776 = vmatpush.msra.mxu0 %v677
        %777 = vmatpush.msra.mxu0 %v675
        %778 = vmatpush.msra.mxu0 %v673
        %779 = vmatpush.msra.mxu0 %v671
        %780 = vmatmul.f32.gmra.mxu0 %v634
        %v781 = vpop.f32.mrf.mxu0
        %v782 = vadd.f32 %v759, %v781
        %783 = vmatmul.f32.gmra.mxu0 %v637
        %v784 = vpop.f32.mrf.mxu0
        %v785 = vadd.f32 %v762, %v784
        %786 = vdwg.mxu0
        %787 = vmatpush.msra.mxu0 %v733
        %788 = vmatpush.msra.mxu0 %v731
        %789 = vmatpush.msra.mxu0 %v729
        %790 = vmatpush.msra.mxu0 %v727
        %791 = vmatpush.msra.mxu0 %v725
        %792 = vmatpush.msra.mxu0 %v723
        %793 = vmatpush.msra.mxu0 %v721
        %794 = vmatpush.msra.mxu0 %v719
        %795 = vmatpush.msra.mxu0 %v717
        %796 = vmatpush.msra.mxu0 %v715
        %797 = vmatpush.msra.mxu0 %v713
        %798 = vmatpush.msra.mxu0 %v711
        %799 = vmatpush.msra.mxu0 %v709
        %800 = vmatpush.msra.mxu0 %v707
        %801 = vmatpush.msra.mxu0 %v705
        %802 = vmatpush.msra.mxu0 %v703
        %803 = vmatmul.f32.gmra.mxu0 %v635
        %v804 = vpop.f32.mrf.mxu0
        %v805 = vadd.f32 %v782, %v804
        %806 = vmatmul.f32.gmra.mxu0 %v638
        %v807 = vpop.f32.mrf.mxu0
        %v808 = vadd.f32 %v785, %v807
        %809 = vdwg.mxu0
        %810 = vmatpush.msra.mxu0 %v670
        %811 = vmatpush.msra.mxu0 %v668
        %812 = vmatpush.msra.mxu0 %v666
        %813 = vmatpush.msra.mxu0 %v664
        %814 = vmatpush.msra.mxu0 %v662
        %815 = vmatpush.msra.mxu0 %v660
        %816 = vmatpush.msra.mxu0 %v658
        %817 = vmatpush.msra.mxu0 %v656
        %818 = vmatpush.msra.mxu0 %v654
        %819 = vmatpush.msra.mxu0 %v652
        %820 = vmatpush.msra.mxu0 %v650
        %821 = vmatpush.msra.mxu0 %v648
        %822 = vmatpush.msra.mxu0 %v646
        %823 = vmatpush.msra.mxu0 %v644
        %824 = vmatpush.msra.mxu0 %v642
        %825 = vmatpush.msra.mxu0 %v640
        %826 = vmatmul.f32.gmra.mxu0 %v633
        %v827 = vpop.f32.mrf.mxu0
        %v828 = vadd.f32 %v738, %v827
        %829 = vmatmul.f32.gmra.mxu0 %v636
        %v830 = vpop.f32.mrf.mxu0
        %v831 = vadd.f32 %v738, %v830
        %832 = vdwg.mxu0
        %833 = vmatpush.msra.mxu0 %v702
        %834 = vmatpush.msra.mxu0 %v700
        %835 = vmatpush.msra.mxu0 %v698
        %836 = vmatpush.msra.mxu0 %v696
        %837 = vmatpush.msra.mxu0 %v694
        %838 = vmatpush.msra.mxu0 %v692
        %839 = vmatpush.msra.mxu0 %v690
        %840 = vmatpush.msra.mxu0 %v688
        %841 = vmatpush.msra.mxu0 %v686
        %842 = vmatpush.msra.mxu0 %v684
        %843 = vmatpush.msra.mxu0 %v682
        %844 = vmatpush.msra.mxu0 %v680
        %845 = vmatpush.msra.mxu0 %v678
        %846 = vmatpush.msra.mxu0 %v676
        %847 = vmatpush.msra.mxu0 %v674
        %848 = vmatpush.msra.mxu0 %v672
        %849 = vmatmul.f32.gmra.mxu0 %v634
        %v850 = vpop.f32.mrf.mxu0
        %v851 = vadd.f32 %v828, %v850
        %852 = vmatmul.f32.gmra.mxu0 %v637
        %v853 = vpop.f32.mrf.mxu0
        %v854 = vadd.f32 %v831, %v853
        %855 = vdwg.mxu0
        %856 = vmatpush.msra.mxu0 %v734
        %857 = vmatpush.msra.mxu0 %v732
        %858 = vmatpush.msra.mxu0 %v730
        %859 = vmatpush.msra.mxu0 %v728
        %860 = vmatpush.msra.mxu0 %v726
        %861 = vmatpush.msra.mxu0 %v724
        %862 = vmatpush.msra.mxu0 %v722
        %863 = vmatpush.msra.mxu0 %v720
        %864 = vmatpush.msra.mxu0 %v718
        %865 = vmatpush.msra.mxu0 %v716
        %866 = vmatpush.msra.mxu0 %v714
        %867 = vmatpush.msra.mxu0 %v712
        %868 = vmatpush.msra.mxu0 %v710
        %869 = vmatpush.msra.mxu0 %v708
        %870 = vmatpush.msra.mxu0 %v706
        %871 = vmatpush.msra.mxu0 %v704
        %872 = vmatmul.f32.gmra.mxu0 %v635
        %v873 = vpop.f32.mrf.mxu0
        %v874 = vadd.f32 %v851, %v873
        %875 = vmatmul.f32.gmra.mxu0 %v638
        %v876 = vpop.f32.mrf.mxu0
        %v877 = vadd.f32 %v854, %v876
        %878 = vdwg.mxu0
        %v879 = vmax.f32 %v805, 0.0
        %v880 = vmax.f32 %v874, 0.0
        %v881 = vmax.f32 %v808, 0.0
        %v882 = vmax.f32 %v877, 0.0
        %v883 = vld [vmem:[%s632 + $0x10] sm:$0xff]
        %v884 = vld [vmem:[%s632 + $0x18] sm:$0xff]
        %v885 = vld [vmem:[#allocation6] sm:$0xff]
        %v886 = vld [vmem:[#allocation6 + $0x8] sm:$0xff]
        %v887 = vld [vmem:[#allocation6 + $0x10] sm:$0xff]
        %v888 = vld [vmem:[#allocation6 + $0x18] sm:$0xff]
        %v889 = vld [vmem:[#allocation6 + $0x20] sm:$0xff]
        %v890 = vld [vmem:[#allocation6 + $0x28] sm:$0xff]
        %v891 = vld [vmem:[#allocation6 + $0x30] sm:$0xff]
        %v892 = vld [vmem:[#allocation6 + $0x38] sm:$0xff]
        %v893 = vld [vmem:[#allocation6 + $0x40] sm:$0xff]
        %v894 = vld [vmem:[#allocation6 + $0x48] sm:$0xff]
        %v895 = vld [vmem:[#allocation6 + $0x50] sm:$0xff]
        %v896 = vld [vmem:[#allocation6 + $0x58] sm:$0xff]
        %v897 = vld [vmem:[#allocation6 + $0x60] sm:$0xff]
        %v898 = vld [vmem:[#allocation6 + $0x68] sm:$0xff]
        %v899 = vld [vmem:[#allocation6 + $0x70] sm:$0xff]
        %v900 = vld [vmem:[#allocation6 + $0x78] sm:$0xff]
        %v901 = vld [vmem:[#allocation6 + $0x80] sm:$0xff]
        %v902 = vld [vmem:[#allocation6 + $0x88] sm:$0xff]
        %v903 = vld [vmem:[#allocation6 + $0x90] sm:$0xff]
        %v904 = vld [vmem:[#allocation6 + $0x98] sm:$0xff]
        %v905 = vld [vmem:[#allocation6 + $0xa0] sm:$0xff]
        %v906 = vld [vmem:[#allocation6 + $0xa8] sm:$0xff]
        %v907 = vld [vmem:[#allocation6 + $0xb0] sm:$0xff]
        %v908 = vld [vmem:[#allocation6 + $0xb8] sm:$0xff]
        %v909 = vld [vmem:[#allocation6 + $0xc0] sm:$0xff]
        %v910 = vld [vmem:[#allocation6 + $0xc8] sm:$0xff]
        %v911 = vld [vmem:[#allocation6 + $0xd0] sm:$0xff]
        %v912 = vld [vmem:[#allocation6 + $0xd8] sm:$0xff]
        %v913 = vld [vmem:[#allocation6 + $0xe0] sm:$0xff]
        %v914 = vld [vmem:[#allocation6 + $0xe8] sm:$0xff]
        %v915 = vld [vmem:[#allocation6 + $0xf0] sm:$0xff]
        %v916 = vld [vmem:[#allocation6 + $0xf8] sm:$0xff]
        %v917 = vld [vmem:[#allocation6 + $0x100] sm:$0xff]
        %v918 = vld [vmem:[#allocation6 + $0x108] sm:$0xff]
        %v919 = vld [vmem:[#allocation6 + $0x110] sm:$0xff]
        %v920 = vld [vmem:[#allocation6 + $0x118] sm:$0xff]
        %v921 = vld [vmem:[#allocation6 + $0x120] sm:$0xff]
        %v922 = vld [vmem:[#allocation6 + $0x128] sm:$0xff]
        %v923 = vld [vmem:[#allocation6 + $0x130] sm:$0xff]
        %v924 = vld [vmem:[#allocation6 + $0x138] sm:$0xff]
        %v925 = vld [vmem:[#allocation6 + $0x140] sm:$0xff]
        %v926 = vld [vmem:[#allocation6 + $0x148] sm:$0xff]
        %v927 = vld [vmem:[#allocation6 + $0x150] sm:$0xff]
        %v928 = vld [vmem:[#allocation6 + $0x158] sm:$0xff]
        %v929 = vld [vmem:[#allocation6 + $0x160] sm:$0xff]
        %v930 = vld [vmem:[#allocation6 + $0x168] sm:$0xff]
        %v931 = vld [vmem:[#allocation6 + $0x170] sm:$0xff]
        %v932 = vld [vmem:[#allocation6 + $0x178] sm:$0xff]
        %v933 = vld [vmem:[#allocation6 + $0x180] sm:$0xff]
        %v934 = vld [vmem:[#allocation6 + $0x188] sm:$0xff]
        %v935 = vld [vmem:[#allocation6 + $0x190] sm:$0xff]
        %v936 = vld [vmem:[#allocation6 + $0x198] sm:$0xff]
        %v937 = vld [vmem:[#allocation6 + $0x1a0] sm:$0xff]
        %v938 = vld [vmem:[#allocation6 + $0x1a8] sm:$0xff]
        %v939 = vld [vmem:[#allocation6 + $0x1b0] sm:$0xff]
        %v940 = vld [vmem:[#allocation6 + $0x1b8] sm:$0xff]
        %v941 = vld [vmem:[#allocation6 + $0x1c0] sm:$0xff]
        %v942 = vld [vmem:[#allocation6 + $0x1c8] sm:$0xff]
        %v943 = vld [vmem:[#allocation6 + $0x1d0] sm:$0xff]
        %v944 = vld [vmem:[#allocation6 + $0x1d8] sm:$0xff]
        %v945 = vld [vmem:[#allocation6 + $0x1e0] sm:$0xff]
        %v946 = vld [vmem:[#allocation6 + $0x1e8] sm:$0xff]
        %v947 = vld [vmem:[#allocation6 + $0x1f0] sm:$0xff]
        %v948 = vld [vmem:[#allocation6 + $0x1f8] sm:$0xff]
        %v949 = vld [vmem:[%s632] sm:$0xfe]
        %v950 = vld [vmem:[%s632 + $0x20] sm:$0x1]
        %v951 = vld [vmem:[#allocation9] sm:$0xff]
        %v952 = vld [vmem:[#allocation9 + $0x8] sm:$0xff]
        %v953 = vld [vmem:[#allocation9 + $0x10] sm:$0xff]
        %v954 = vld [vmem:[#allocation9 + $0x18] sm:$0xff]
        %v955 = vld [vmem:[#allocation9 + $0x20] sm:$0xff]
        %v956 = vld [vmem:[#allocation9 + $0x28] sm:$0xff]
        %v957 = vld [vmem:[#allocation9 + $0x30] sm:$0xff]
        %v958 = vld [vmem:[#allocation9 + $0x38] sm:$0xff]
        %v959 = vld [vmem:[#allocation9 + $0x40] sm:$0xff]
        %v960 = vld [vmem:[#allocation9 + $0x48] sm:$0xff]
        %v961 = vld [vmem:[#allocation9 + $0x50] sm:$0xff]
        %v962 = vld [vmem:[#allocation9 + $0x58] sm:$0xff]
        %v963 = vld [vmem:[#allocation9 + $0x60] sm:$0xff]
        %v964 = vld [vmem:[#allocation9 + $0x68] sm:$0xff]
        %v965 = vld [vmem:[#allocation9 + $0x70] sm:$0xff]
        %v966 = vld [vmem:[#allocation9 + $0x78] sm:$0xff]
        %v967 = vld [vmem:[#allocation9 + $0x80] sm:$0xff]
        %v968 = vld [vmem:[#allocation9 + $0x88] sm:$0xff]
        %v969 = vld [vmem:[#allocation9 + $0x90] sm:$0xff]
        %v970 = vld [vmem:[#allocation9 + $0x98] sm:$0xff]
        %v971 = vld [vmem:[#allocation9 + $0xa0] sm:$0xff]
        %v972 = vld [vmem:[#allocation9 + $0xa8] sm:$0xff]
        %v973 = vld [vmem:[#allocation9 + $0xb0] sm:$0xff]
        %v974 = vld [vmem:[#allocation9 + $0xb8] sm:$0xff]
        %v975 = vld [vmem:[#allocation9 + $0xc0] sm:$0xff]
        %v976 = vld [vmem:[#allocation9 + $0xc8] sm:$0xff]
        %v977 = vld [vmem:[#allocation9 + $0xd0] sm:$0xff]
        %v978 = vld [vmem:[#allocation9 + $0xd8] sm:$0xff]
        %v979 = vld [vmem:[#allocation9 + $0xe0] sm:$0xff]
        %v980 = vld [vmem:[#allocation9 + $0xe8] sm:$0xff]
        %v981 = vld [vmem:[#allocation9 + $0xf0] sm:$0xff]
        %v982 = vld [vmem:[#allocation9 + $0xf8] sm:$0xff]
        %vm985 = vcmask 1046528
        %v986 = vrot.slane %v949, 1
        %v987 = vrot.slane %v950, 1
        %v988 = vsel %vm985, %v986, %v987
        %990 = vmatpush.msra.mxu0 %v981
        %991 = vmatpush.msra.mxu0 %v979
        %992 = vmatpush.msra.mxu0 %v977
        %993 = vmatpush.msra.mxu0 %v975
        %994 = vmatpush.msra.mxu0 %v973
        %995 = vmatpush.msra.mxu0 %v971
        %996 = vmatpush.msra.mxu0 %v969
        %997 = vmatpush.msra.mxu0 %v967
        %998 = vmatpush.msra.mxu0 %v965
        %999 = vmatpush.msra.mxu0 %v963
        %1000 = vmatpush.msra.mxu0 %v961
        %1001 = vmatpush.msra.mxu0 %v959
        %1002 = vmatpush.msra.mxu0 %v957
        %1003 = vmatpush.msra.mxu0 %v955
        %1004 = vmatpush.msra.mxu0 %v953
        %1005 = vmatpush.msra.mxu0 %v951
        %1006 = vmatmul.f32.gmra.mxu0 %v988
        %v1007 = vpop.f32.mrf.mxu0
        %v1008 = vadd.f32 0.0, %v1007
        %1009 = vdwg.mxu0
        %1010 = vmatpush.msra.mxu0 %v982
        %1011 = vmatpush.msra.mxu0 %v980
        %1012 = vmatpush.msra.mxu0 %v978
        %1013 = vmatpush.msra.mxu0 %v976
        %1014 = vmatpush.msra.mxu0 %v974
        %1015 = vmatpush.msra.mxu0 %v972
        %1016 = vmatpush.msra.mxu0 %v970
        %1017 = vmatpush.msra.mxu0 %v968
        %1018 = vmatpush.msra.mxu0 %v966
        %1019 = vmatpush.msra.mxu0 %v964
        %1020 = vmatpush.msra.mxu0 %v962
        %1021 = vmatpush.msra.mxu0 %v960
        %1022 = vmatpush.msra.mxu0 %v958
        %1023 = vmatpush.msra.mxu0 %v956
        %1024 = vmatpush.msra.mxu0 %v954
        %1025 = vmatpush.msra.mxu0 %v952
        %1026 = vmatmul.f32.gmra.mxu0 %v988
        %v1027 = vpop.f32.mrf.mxu0
        %v1028 = vadd.f32 0.0, %v1027
        %1029 = vdwg.mxu0
        %1030 = vmatpush.msra.mxu0 %v915
        %1031 = vmatpush.msra.mxu0 %v913
        %1032 = vmatpush.msra.mxu0 %v911
        %1033 = vmatpush.msra.mxu0 %v909
        %1034 = vmatpush.msra.mxu0 %v907
        %1035 = vmatpush.msra.mxu0 %v905
        %1036 = vmatpush.msra.mxu0 %v903
        %1037 = vmatpush.msra.mxu0 %v901
        %1038 = vmatpush.msra.mxu0 %v899
        %1039 = vmatpush.msra.mxu0 %v897
        %1040 = vmatpush.msra.mxu0 %v895
        %1041 = vmatpush.msra.mxu0 %v893
        %1042 = vmatpush.msra.mxu0 %v891
        %1043 = vmatpush.msra.mxu0 %v889
        %1044 = vmatpush.msra.mxu0 %v887
        %1045 = vmatpush.msra.mxu0 %v885
        %1046 = vmatmul.f32.gmra.mxu0 %v883
        %v1047 = vpop.f32.mrf.mxu0
        %v1048 = vadd.f32 %v1008, %v1047
        %1049 = vdwg.mxu0
        %1050 = vmatpush.msra.mxu0 %v947
        %1051 = vmatpush.msra.mxu0 %v945
        %1052 = vmatpush.msra.mxu0 %v943
        %1053 = vmatpush.msra.mxu0 %v941
        %1054 = vmatpush.msra.mxu0 %v939
        %1055 = vmatpush.msra.mxu0 %v937
        %1056 = vmatpush.msra.mxu0 %v935
        %1057 = vmatpush.msra.mxu0 %v933
        %1058 = vmatpush.msra.mxu0 %v931
        %1059 = vmatpush.msra.mxu0 %v929
        %1060 = vmatpush.msra.mxu0 %v927
        %1061 = vmatpush.msra.mxu0 %v925
        %1062 = vmatpush.msra.mxu0 %v923
        %1063 = vmatpush.msra.mxu0 %v921
        %1064 = vmatpush.msra.mxu0 %v919
        %1065 = vmatpush.msra.mxu0 %v917
        %1066 = vmatmul.f32.gmra.mxu0 %v884
        %v1067 = vpop.f32.mrf.mxu0
        %v1068 = vadd.f32 %v1048, %v1067
        %1069 = vdwg.mxu0
        %1070 = vmatpush.msra.mxu0 %v916
        %1071 = vmatpush.msra.mxu0 %v914
        %1072 = vmatpush.msra.mxu0 %v912
        %1073 = vmatpush.msra.mxu0 %v910
        %1074 = vmatpush.msra.mxu0 %v908
        %1075 = vmatpush.msra.mxu0 %v906
        %1076 = vmatpush.msra.mxu0 %v904
        %1077 = vmatpush.msra.mxu0 %v902
        %1078 = vmatpush.msra.mxu0 %v900
        %1079 = vmatpush.msra.mxu0 %v898
        %1080 = vmatpush.msra.mxu0 %v896
        %1081 = vmatpush.msra.mxu0 %v894
        %1082 = vmatpush.msra.mxu0 %v892
        %1083 = vmatpush.msra.mxu0 %v890
        %1084 = vmatpush.msra.mxu0 %v888
        %1085 = vmatpush.msra.mxu0 %v886
        %1086 = vmatmul.f32.gmra.mxu0 %v883
        %v1087 = vpop.f32.mrf.mxu0
        %v1088 = vadd.f32 %v1028, %v1087
        %1089 = vdwg.mxu0
        %1090 = vmatpush.msra.mxu0 %v948
        %1091 = vmatpush.msra.mxu0 %v946
        %1092 = vmatpush.msra.mxu0 %v944
        %1093 = vmatpush.msra.mxu0 %v942
        %1094 = vmatpush.msra.mxu0 %v940
        %1095 = vmatpush.msra.mxu0 %v938
        %1096 = vmatpush.msra.mxu0 %v936
        %1097 = vmatpush.msra.mxu0 %v934
        %1098 = vmatpush.msra.mxu0 %v932
        %1099 = vmatpush.msra.mxu0 %v930
        %1100 = vmatpush.msra.mxu0 %v928
        %1101 = vmatpush.msra.mxu0 %v926
        %1102 = vmatpush.msra.mxu0 %v924
        %1103 = vmatpush.msra.mxu0 %v922
        %1104 = vmatpush.msra.mxu0 %v920
        %1105 = vmatpush.msra.mxu0 %v918
        %1106 = vmatmul.f32.gmra.mxu0 %v884
        %v1107 = vpop.f32.mrf.mxu0
        %v1108 = vadd.f32 %v1088, %v1107
        %1109 = vdwg.mxu0
        %v1110 = vadd.f32 %v1068, %v737
        %v1111 = vadd.f32 %v1108, %v738
        %v1112 = vmax.f32 %v1110, 0.0
        %v1113 = vmax.f32 %v1111, 0.0
        %1114 = vst [vmem:[#allocation2] sm:$0xff] %v879
        %1115 = vst [vmem:[#allocation2 + $0x8] sm:$0xff] %v880
        %1116 = vst [vmem:[#allocation2 + $0x20] sm:$0x1] %v881
        %1117 = vst [vmem:[#allocation2 + $0x28] sm:$0x1] %v882
        %1118 = vst [vmem:[#allocation2 + $0x10] sm:$0xff] %v1112
        %1119 = vst [vmem:[#allocation2 + $0x18] sm:$0xff] %v1113
        %v1120 = vlaneseq
        %vm1121 = vcmp.ge.s32.totalorder %v1120, 0
        %vm1122 = vcmp.lt.s32.totalorder %v1120, 256
        %vm1123 = vmand %vm1121, %vm1122
        %s1124 = scalar_lea.vmem [#allocation2], 48
        %1125 = vst.msk [vmem:[%s1124] ss:$8 sm:$0x3] %vm1123, 0.0
        %1126 = vst.msk [vmem:[%s1124] ss:$8 sm:$0x0] %vm1123, 0.0
        %v1127 = vld [vmem:[#allocation2] sm:$0xff]
        %v1128 = vld [vmem:[#allocation2 + $0x8] sm:$0xff]
        %v1129 = vld [vmem:[#allocation2 + $0x10] sm:$0xff]
        %v1130 = vld [vmem:[#allocation2 + $0x18] sm:$0xff]
        %v1131 = vld [vmem:[#allocation11] sm:$0xff]
        %v1132 = vld [vmem:[#allocation11 + $0x8] sm:$0xff]
        %v1133 = vld [vmem:[#allocation11 + $0x10] sm:$0xff]
        %v1134 = vld [vmem:[#allocation11 + $0x18] sm:$0xff]
        %v1135 = vld [vmem:[#allocation11 + $0x20] sm:$0xff]
        %v1136 = vld [vmem:[#allocation11 + $0x28] sm:$0xff]
        %v1137 = vld [vmem:[#allocation11 + $0x30] sm:$0xff]
        %v1138 = vld [vmem:[#allocation11 + $0x38] sm:$0xff]
        %v1139 = vld [vmem:[#allocation11 + $0x40] sm:$0xff]
        %v1140 = vld [vmem:[#allocation11 + $0x48] sm:$0xff]
        %v1141 = vld [vmem:[#allocation11 + $0x50] sm:$0xff]
        %v1142 = vld [vmem:[#allocation11 + $0x58] sm:$0xff]
        %v1143 = vld [vmem:[#allocation11 + $0x60] sm:$0xff]
        %v1144 = vld [vmem:[#allocation11 + $0x68] sm:$0xff]
        %v1145 = vld [vmem:[#allocation11 + $0x70] sm:$0xff]
        %v1146 = vld [vmem:[#allocation11 + $0x78] sm:$0xff]
        %v1147 = vld [vmem:[#allocation11 + $0x80] sm:$0xff]
        %v1148 = vld [vmem:[#allocation11 + $0x88] sm:$0xff]
        %v1149 = vld [vmem:[#allocation11 + $0x90] sm:$0xff]
        %v1150 = vld [vmem:[#allocation11 + $0x98] sm:$0xff]
        %v1151 = vld [vmem:[#allocation11 + $0xa0] sm:$0xff]
        %v1152 = vld [vmem:[#allocation11 + $0xa8] sm:$0xff]
        %v1153 = vld [vmem:[#allocation11 + $0xb0] sm:$0xff]
        %v1154 = vld [vmem:[#allocation11 + $0xb8] sm:$0xff]
        %v1155 = vld [vmem:[#allocation11 + $0xc0] sm:$0xff]
        %v1156 = vld [vmem:[#allocation11 + $0xc8] sm:$0xff]
        %v1157 = vld [vmem:[#allocation11 + $0xd0] sm:$0xff]
        %v1158 = vld [vmem:[#allocation11 + $0xd8] sm:$0xff]
        %v1159 = vld [vmem:[#allocation11 + $0xe0] sm:$0xff]
        %v1160 = vld [vmem:[#allocation11 + $0xe8] sm:$0xff]
        %v1161 = vld [vmem:[#allocation11 + $0xf0] sm:$0xff]
        %v1162 = vld [vmem:[#allocation11 + $0xf8] sm:$0xff]
        %v1163 = vld [vmem:[#allocation11 + $0x100] sm:$0xff]
        %v1164 = vld [vmem:[#allocation11 + $0x108] sm:$0xff]
        %v1165 = vld [vmem:[#allocation11 + $0x110] sm:$0xff]
        %v1166 = vld [vmem:[#allocation11 + $0x118] sm:$0xff]
        %v1167 = vld [vmem:[#allocation11 + $0x120] sm:$0xff]
        %v1168 = vld [vmem:[#allocation11 + $0x128] sm:$0xff]
        %v1169 = vld [vmem:[#allocation11 + $0x130] sm:$0xff]
        %v1170 = vld [vmem:[#allocation11 + $0x138] sm:$0xff]
        %v1171 = vld [vmem:[#allocation11 + $0x140] sm:$0xff]
        %v1172 = vld [vmem:[#allocation11 + $0x148] sm:$0xff]
        %v1173 = vld [vmem:[#allocation11 + $0x150] sm:$0xff]
        %v1174 = vld [vmem:[#allocation11 + $0x158] sm:$0xff]
        %v1175 = vld [vmem:[#allocation11 + $0x160] sm:$0xff]
        %v1176 = vld [vmem:[#allocation11 + $0x168] sm:$0xff]
        %v1177 = vld [vmem:[#allocation11 + $0x170] sm:$0xff]
        %v1178 = vld [vmem:[#allocation11 + $0x178] sm:$0xff]
        %v1179 = vld [vmem:[#allocation11 + $0x180] sm:$0xff]
        %v1180 = vld [vmem:[#allocation11 + $0x188] sm:$0xff]
        %v1181 = vld [vmem:[#allocation11 + $0x190] sm:$0xff]
        %v1182 = vld [vmem:[#allocation11 + $0x198] sm:$0xff]
        %v1183 = vld [vmem:[#allocation11 + $0x1a0] sm:$0xff]
        %v1184 = vld [vmem:[#allocation11 + $0x1a8] sm:$0xff]
        %v1185 = vld [vmem:[#allocation11 + $0x1b0] sm:$0xff]
        %v1186 = vld [vmem:[#allocation11 + $0x1b8] sm:$0xff]
        %v1187 = vld [vmem:[#allocation11 + $0x1c0] sm:$0xff]
        %v1188 = vld [vmem:[#allocation11 + $0x1c8] sm:$0xff]
        %v1189 = vld [vmem:[#allocation11 + $0x1d0] sm:$0xff]
        %v1190 = vld [vmem:[#allocation11 + $0x1d8] sm:$0xff]
        %v1191 = vld [vmem:[#allocation11 + $0x1e0] sm:$0xff]
        %v1192 = vld [vmem:[#allocation11 + $0x1e8] sm:$0xff]
        %v1193 = vld [vmem:[#allocation11 + $0x1f0] sm:$0xff]
        %v1194 = vld [vmem:[#allocation11 + $0x1f8] sm:$0xff]
        %v1195 = vld [vmem:[#allocation2] sm:$0xfe]
        %v1196 = vld [vmem:[#allocation2 + $0x8] sm:$0xfe]
        %v1197 = vld [vmem:[#allocation2 + $0x20] sm:$0x1]
        %v1198 = vld [vmem:[#allocation2 + $0x28] sm:$0x1]
        %v1199 = vld [vmem:[%s6] sm:$0xff]
        %v1200 = vld [vmem:[%s6 + $0x8] sm:$0xff]
        %v1201 = vld [vmem:[%s6 + $0x10] sm:$0xff]
        %v1202 = vld [vmem:[%s6 + $0x18] sm:$0xff]
        %v1203 = vld [vmem:[%s6 + $0x20] sm:$0xff]
        %v1204 = vld [vmem:[%s6 + $0x28] sm:$0xff]
        %v1205 = vld [vmem:[%s6 + $0x30] sm:$0xff]
        %v1206 = vld [vmem:[%s6 + $0x38] sm:$0xff]
        %v1207 = vld [vmem:[%s6 + $0x40] sm:$0xff]
        %v1208 = vld [vmem:[%s6 + $0x48] sm:$0xff]
        %v1209 = vld [vmem:[%s6 + $0x50] sm:$0xff]
        %v1210 = vld [vmem:[%s6 + $0x58] sm:$0xff]
        %v1211 = vld [vmem:[%s6 + $0x60] sm:$0xff]
        %v1212 = vld [vmem:[%s6 + $0x68] sm:$0xff]
        %v1213 = vld [vmem:[%s6 + $0x70] sm:$0xff]
        %v1214 = vld [vmem:[%s6 + $0x78] sm:$0xff]
        %v1215 = vld [vmem:[%s6 + $0x80] sm:$0xff]
        %v1216 = vld [vmem:[%s6 + $0x88] sm:$0xff]
        %v1217 = vld [vmem:[%s6 + $0x90] sm:$0xff]
        %v1218 = vld [vmem:[%s6 + $0x98] sm:$0xff]
        %v1219 = vld [vmem:[%s6 + $0xa0] sm:$0xff]
        %v1220 = vld [vmem:[%s6 + $0xa8] sm:$0xff]
        %v1221 = vld [vmem:[%s6 + $0xb0] sm:$0xff]
        %v1222 = vld [vmem:[%s6 + $0xb8] sm:$0xff]
        %v1223 = vld [vmem:[%s6 + $0xc0] sm:$0xff]
        %v1224 = vld [vmem:[%s6 + $0xc8] sm:$0xff]
        %v1225 = vld [vmem:[%s6 + $0xd0] sm:$0xff]
        %v1226 = vld [vmem:[%s6 + $0xd8] sm:$0xff]
        %v1227 = vld [vmem:[%s6 + $0xe0] sm:$0xff]
        %v1228 = vld [vmem:[%s6 + $0xe8] sm:$0xff]
        %v1229 = vld [vmem:[%s6 + $0xf0] sm:$0xff]
        %v1230 = vld [vmem:[%s6 + $0xf8] sm:$0xff]
        %v1235 = vrot.slane %v1195, 1
        %v1236 = vrot.slane %v1197, 1
        %v1237 = vsel %vm985, %v1235, %v1236
        %v1238 = vrot.slane %v1196, 1
        %v1239 = vrot.slane %v1198, 1
        %v1240 = vsel %vm985, %v1238, %v1239
        %1243 = vmatpush.msra.mxu0 %v1214
        %1244 = vmatpush.msra.mxu0 %v1213
        %1245 = vmatpush.msra.mxu0 %v1212
        %1246 = vmatpush.msra.mxu0 %v1211
        %1247 = vmatpush.msra.mxu0 %v1210
        %1248 = vmatpush.msra.mxu0 %v1209
        %1249 = vmatpush.msra.mxu0 %v1208
        %1250 = vmatpush.msra.mxu0 %v1207
        %1251 = vmatpush.msra.mxu0 %v1206
        %1252 = vmatpush.msra.mxu0 %v1205
        %1253 = vmatpush.msra.mxu0 %v1204
        %1254 = vmatpush.msra.mxu0 %v1203
        %1255 = vmatpush.msra.mxu0 %v1202
        %1256 = vmatpush.msra.mxu0 %v1201
        %1257 = vmatpush.msra.mxu0 %v1200
        %1258 = vmatpush.msra.mxu0 %v1199
        %1259 = vmatmul.f32.gmra.mxu0 %v1237
        %v1260 = vpop.f32.mrf.mxu0
        %v1261 = vadd.f32 0.0, %v1260
        %1262 = vdwg.mxu0
        %1263 = vmatpush.msra.mxu0 %v1230
        %1264 = vmatpush.msra.mxu0 %v1229
        %1265 = vmatpush.msra.mxu0 %v1228
        %1266 = vmatpush.msra.mxu0 %v1227
        %1267 = vmatpush.msra.mxu0 %v1226
        %1268 = vmatpush.msra.mxu0 %v1225
        %1269 = vmatpush.msra.mxu0 %v1224
        %1270 = vmatpush.msra.mxu0 %v1223
        %1271 = vmatpush.msra.mxu0 %v1222
        %1272 = vmatpush.msra.mxu0 %v1221
        %1273 = vmatpush.msra.mxu0 %v1220
        %1274 = vmatpush.msra.mxu0 %v1219
        %1275 = vmatpush.msra.mxu0 %v1218
        %1276 = vmatpush.msra.mxu0 %v1217
        %1277 = vmatpush.msra.mxu0 %v1216
        %1278 = vmatpush.msra.mxu0 %v1215
        %1279 = vmatmul.f32.gmra.mxu0 %v1240
        %v1280 = vpop.f32.mrf.mxu0
        %v1281 = vadd.f32 %v1261, %v1280
        %1282 = vdwg.mxu0
        %1283 = vmatpush.msra.mxu0 %v1146
        %1284 = vmatpush.msra.mxu0 %v1145
        %1285 = vmatpush.msra.mxu0 %v1144
        %1286 = vmatpush.msra.mxu0 %v1143
        %1287 = vmatpush.msra.mxu0 %v1142
        %1288 = vmatpush.msra.mxu0 %v1141
        %1289 = vmatpush.msra.mxu0 %v1140
        %1290 = vmatpush.msra.mxu0 %v1139
        %1291 = vmatpush.msra.mxu0 %v1138
        %1292 = vmatpush.msra.mxu0 %v1137
        %1293 = vmatpush.msra.mxu0 %v1136
        %1294 = vmatpush.msra.mxu0 %v1135
        %1295 = vmatpush.msra.mxu0 %v1134
        %1296 = vmatpush.msra.mxu0 %v1133
        %1297 = vmatpush.msra.mxu0 %v1132
        %1298 = vmatpush.msra.mxu0 %v1131
        %1299 = vmatmul.f32.gmra.mxu0 %v1127
        %v1300 = vpop.f32.mrf.mxu0
        %v1301 = vadd.f32 %v1281, %v1300
        %1302 = vdwg.mxu0
        %1303 = vmatpush.msra.mxu0 %v1162
        %1304 = vmatpush.msra.mxu0 %v1161
        %1305 = vmatpush.msra.mxu0 %v1160
        %1306 = vmatpush.msra.mxu0 %v1159
        %1307 = vmatpush.msra.mxu0 %v1158
        %1308 = vmatpush.msra.mxu0 %v1157
        %1309 = vmatpush.msra.mxu0 %v1156
        %1310 = vmatpush.msra.mxu0 %v1155
        %1311 = vmatpush.msra.mxu0 %v1154
        %1312 = vmatpush.msra.mxu0 %v1153
        %1313 = vmatpush.msra.mxu0 %v1152
        %1314 = vmatpush.msra.mxu0 %v1151
        %1315 = vmatpush.msra.mxu0 %v1150
        %1316 = vmatpush.msra.mxu0 %v1149
        %1317 = vmatpush.msra.mxu0 %v1148
        %1318 = vmatpush.msra.mxu0 %v1147
        %1319 = vmatmul.f32.gmra.mxu0 %v1128
        %v1320 = vpop.f32.mrf.mxu0
        %v1321 = vadd.f32 %v1301, %v1320
        %1322 = vdwg.mxu0
        %1323 = vmatpush.msra.mxu0 %v1178
        %1324 = vmatpush.msra.mxu0 %v1177
        %1325 = vmatpush.msra.mxu0 %v1176
        %1326 = vmatpush.msra.mxu0 %v1175
        %1327 = vmatpush.msra.mxu0 %v1174
        %1328 = vmatpush.msra.mxu0 %v1173
        %1329 = vmatpush.msra.mxu0 %v1172
        %1330 = vmatpush.msra.mxu0 %v1171
        %1331 = vmatpush.msra.mxu0 %v1170
        %1332 = vmatpush.msra.mxu0 %v1169
        %1333 = vmatpush.msra.mxu0 %v1168
        %1334 = vmatpush.msra.mxu0 %v1167
        %1335 = vmatpush.msra.mxu0 %v1166
        %1336 = vmatpush.msra.mxu0 %v1165
        %1337 = vmatpush.msra.mxu0 %v1164
        %1338 = vmatpush.msra.mxu0 %v1163
        %1339 = vmatmul.f32.gmra.mxu0 %v1129
        %v1340 = vpop.f32.mrf.mxu0
        %v1341 = vadd.f32 %v1321, %v1340
        %1342 = vdwg.mxu0
        %1343 = vmatpush.msra.mxu0 %v1194
        %1344 = vmatpush.msra.mxu0 %v1193
        %1345 = vmatpush.msra.mxu0 %v1192
        %1346 = vmatpush.msra.mxu0 %v1191
        %1347 = vmatpush.msra.mxu0 %v1190
        %1348 = vmatpush.msra.mxu0 %v1189
        %1349 = vmatpush.msra.mxu0 %v1188
        %1350 = vmatpush.msra.mxu0 %v1187
        %1351 = vmatpush.msra.mxu0 %v1186
        %1352 = vmatpush.msra.mxu0 %v1185
        %1353 = vmatpush.msra.mxu0 %v1184
        %1354 = vmatpush.msra.mxu0 %v1183
        %1355 = vmatpush.msra.mxu0 %v1182
        %1356 = vmatpush.msra.mxu0 %v1181
        %1357 = vmatpush.msra.mxu0 %v1180
        %1358 = vmatpush.msra.mxu0 %v1179
        %1359 = vmatmul.f32.gmra.mxu0 %v1130
        %v1360 = vpop.f32.mrf.mxu0
        %v1361 = vadd.f32 %v1341, %v1360
        %1362 = vdwg.mxu0
        %v1363 = vld [vmem:[#allocation12] sm:$0x1]
        %v1365 = vperm.slane %v1363, 0
        %v1367 = vadd.f32 %v1361, %v1365
        %v1368 = vmax.f32 %v1367, 0.0
        %1369 = vst [vmem:[#allocation3] sm:$0xff] %v1368
        %v1370 = vld [vmem:[#allocation3] sm:$0x3f]
        %v1371 = vld [vmem:[#allocation14] sm:$0xff]
        %v1372 = vld [vmem:[#allocation14 + $0x8] sm:$0xff]
        %v1373 = vld [vmem:[#allocation14 + $0x10] sm:$0xff]
        %v1374 = vld [vmem:[#allocation14 + $0x18] sm:$0xff]
        %v1375 = vld [vmem:[#allocation14 + $0x20] sm:$0xff]
        %v1376 = vld [vmem:[#allocation14 + $0x28] sm:$0xff]
        %v1377 = vld [vmem:[#allocation14 + $0x30] sm:$0xff]
        %v1378 = vld [vmem:[#allocation14 + $0x38] sm:$0xff]
        %v1379 = vld [vmem:[#allocation14 + $0x40] sm:$0xff]
        %v1380 = vld [vmem:[#allocation14 + $0x48] sm:$0xff]
        %v1381 = vld [vmem:[#allocation14 + $0x50] sm:$0xff]
        %v1382 = vld [vmem:[#allocation14 + $0x58] sm:$0xff]
        %v1383 = vld [vmem:[#allocation14 + $0x60] sm:$0xff]
        %v1384 = vld [vmem:[#allocation14 + $0x68] sm:$0xff]
        %v1385 = vld [vmem:[#allocation14 + $0x70] sm:$0xff]
        %v1386 = vld [vmem:[#allocation14 + $0x78] sm:$0xff]
        %v1387 = vld [vmem:[#allocation3 + $0x1] sm:$0x3f]
        %s1388 = scalar_lea.vmem [#allocation14], 128
        %v1389 = vld [vmem:[%s1388] sm:$0xff]
        %v1390 = vld [vmem:[%s1388 + $0x8] sm:$0xff]
        %v1391 = vld [vmem:[%s1388 + $0x10] sm:$0xff]
        %v1392 = vld [vmem:[%s1388 + $0x18] sm:$0xff]
        %v1393 = vld [vmem:[%s1388 + $0x20] sm:$0xff]
        %v1394 = vld [vmem:[%s1388 + $0x28] sm:$0xff]
        %v1395 = vld [vmem:[%s1388 + $0x30] sm:$0xff]
        %v1396 = vld [vmem:[%s1388 + $0x38] sm:$0xff]
        %v1397 = vld [vmem:[%s1388 + $0x40] sm:$0xff]
        %v1398 = vld [vmem:[%s1388 + $0x48] sm:$0xff]
        %v1399 = vld [vmem:[%s1388 + $0x50] sm:$0xff]
        %v1400 = vld [vmem:[%s1388 + $0x58] sm:$0xff]
        %v1401 = vld [vmem:[%s1388 + $0x60] sm:$0xff]
        %v1402 = vld [vmem:[%s1388 + $0x68] sm:$0xff]
        %v1403 = vld [vmem:[%s1388 + $0x70] sm:$0xff]
        %v1404 = vld [vmem:[%s1388 + $0x78] sm:$0xff]
        %1405 = vmatpush.msra.mxu0 %v1404
        %1406 = vmatpush.msra.mxu0 %v1403
        %1407 = vmatpush.msra.mxu0 %v1402
        %1408 = vmatpush.msra.mxu0 %v1401
        %1409 = vmatpush.msra.mxu0 %v1400
        %1410 = vmatpush.msra.mxu0 %v1399
        %1411 = vmatpush.msra.mxu0 %v1398
        %1412 = vmatpush.msra.mxu0 %v1397
        %1413 = vmatpush.msra.mxu0 %v1396
        %1414 = vmatpush.msra.mxu0 %v1395
        %1415 = vmatpush.msra.mxu0 %v1394
        %1416 = vmatpush.msra.mxu0 %v1393
        %1417 = vmatpush.msra.mxu0 %v1392
        %1418 = vmatpush.msra.mxu0 %v1391
        %1419 = vmatpush.msra.mxu0 %v1390
        %1420 = vmatpush.msra.mxu0 %v1389
        %1421 = vmatmul.f32.gmra.mxu0 %v1387
        %v1422 = vpop.f32.mrf.mxu0
        %v1423 = vadd.f32 0.0, %v1422
        %1424 = vdwg.mxu0
        %1425 = vmatpush.msra.mxu0 %v1386
        %1426 = vmatpush.msra.mxu0 %v1385
        %1427 = vmatpush.msra.mxu0 %v1384
        %1428 = vmatpush.msra.mxu0 %v1383
        %1429 = vmatpush.msra.mxu0 %v1382
        %1430 = vmatpush.msra.mxu0 %v1381
        %1431 = vmatpush.msra.mxu0 %v1380
        %1432 = vmatpush.msra.mxu0 %v1379
        %1433 = vmatpush.msra.mxu0 %v1378
        %1434 = vmatpush.msra.mxu0 %v1377
        %1435 = vmatpush.msra.mxu0 %v1376
        %1436 = vmatpush.msra.mxu0 %v1375
        %1437 = vmatpush.msra.mxu0 %v1374
        %1438 = vmatpush.msra.mxu0 %v1373
        %1439 = vmatpush.msra.mxu0 %v1372
        %1440 = vmatpush.msra.mxu0 %v1371
        %1441 = vmatmul.f32.gmra.mxu0 %v1370
        %v1442 = vpop.f32.mrf.mxu0
        %v1443 = vadd.f32 %v1423, %v1442
        %1444 = vdwg.mxu0
        %v1445 = vld [vmem:[#allocation3 + $0x2] sm:$0x3f]
        %s1446 = scalar_lea.vmem [#allocation14], 256
        %v1447 = vld [vmem:[%s1446] sm:$0xff]
        %v1448 = vld [vmem:[%s1446 + $0x8] sm:$0xff]
        %v1449 = vld [vmem:[%s1446 + $0x10] sm:$0xff]
        %v1450 = vld [vmem:[%s1446 + $0x18] sm:$0xff]
        %v1451 = vld [vmem:[%s1446 + $0x20] sm:$0xff]
        %v1452 = vld [vmem:[%s1446 + $0x28] sm:$0xff]
        %v1453 = vld [vmem:[%s1446 + $0x30] sm:$0xff]
        %v1454 = vld [vmem:[%s1446 + $0x38] sm:$0xff]
        %v1455 = vld [vmem:[%s1446 + $0x40] sm:$0xff]
        %v1456 = vld [vmem:[%s1446 + $0x48] sm:$0xff]
        %v1457 = vld [vmem:[%s1446 + $0x50] sm:$0xff]
        %v1458 = vld [vmem:[%s1446 + $0x58] sm:$0xff]
        %v1459 = vld [vmem:[%s1446 + $0x60] sm:$0xff]
        %v1460 = vld [vmem:[%s1446 + $0x68] sm:$0xff]
        %v1461 = vld [vmem:[%s1446 + $0x70] sm:$0xff]
        %v1462 = vld [vmem:[%s1446 + $0x78] sm:$0xff]
        %1463 = vmatpush.msra.mxu0 %v1462
        %1464 = vmatpush.msra.mxu0 %v1461
        %1465 = vmatpush.msra.mxu0 %v1460
        %1466 = vmatpush.msra.mxu0 %v1459
        %1467 = vmatpush.msra.mxu0 %v1458
        %1468 = vmatpush.msra.mxu0 %v1457
        %1469 = vmatpush.msra.mxu0 %v1456
        %1470 = vmatpush.msra.mxu0 %v1455
        %1471 = vmatpush.msra.mxu0 %v1454
        %1472 = vmatpush.msra.mxu0 %v1453
        %1473 = vmatpush.msra.mxu0 %v1452
        %1474 = vmatpush.msra.mxu0 %v1451
        %1475 = vmatpush.msra.mxu0 %v1450
        %1476 = vmatpush.msra.mxu0 %v1449
        %1477 = vmatpush.msra.mxu0 %v1448
        %1478 = vmatpush.msra.mxu0 %v1447
        %1479 = vmatmul.f32.gmra.mxu0 %v1445
        %v1480 = vpop.f32.mrf.mxu0
        %v1481 = vadd.f32 0.0, %v1480
        %1482 = vdwg.mxu0
        %v1483 = vadd.f32 %v1443, %v1481
        %v1484 = vld [vmem:[%s9] sm:$0x1]
        %v1486 = vperm.slane %v1484, 0
        %v1488 = vadd.f32 %v1483, %v1486
        %v1489 = vmax.f32 %v1488, 0.0
        %1490 = vst [vmem:[#allocation4] sm:$0x3f] %v1489
        %v1491 = vld [vmem:[#allocation4] sm:$0xf]
        %v1492 = vld [vmem:[#allocation15] sm:$0xff]
        %v1493 = vld [vmem:[#allocation15 + $0x8] sm:$0xff]
        %v1494 = vld [vmem:[#allocation15 + $0x10] sm:$0xff]
        %v1495 = vld [vmem:[#allocation15 + $0x18] sm:$0xff]
        %v1496 = vld [vmem:[#allocation15 + $0x20] sm:$0xff]
        %v1497 = vld [vmem:[#allocation15 + $0x28] sm:$0xff]
        %v1498 = vld [vmem:[#allocation15 + $0x30] sm:$0xff]
        %v1499 = vld [vmem:[#allocation15 + $0x38] sm:$0xff]
        %v1500 = vld [vmem:[#allocation15 + $0x40] sm:$0xff]
        %v1501 = vld [vmem:[#allocation15 + $0x48] sm:$0xff]
        %v1502 = vld [vmem:[#allocation15 + $0x50] sm:$0xff]
        %v1503 = vld [vmem:[#allocation15 + $0x58] sm:$0xff]
        %v1504 = vld [vmem:[#allocation15 + $0x60] sm:$0xff]
        %v1505 = vld [vmem:[#allocation15 + $0x68] sm:$0xff]
        %v1506 = vld [vmem:[#allocation15 + $0x70] sm:$0xff]
        %v1507 = vld [vmem:[#allocation15 + $0x78] sm:$0xff]
        %v1508 = vld [vmem:[#allocation4 + $0x1] sm:$0xf]
        %s1509 = scalar_lea.vmem [#allocation15], 128
        %v1510 = vld [vmem:[%s1509] sm:$0xff]
        %v1511 = vld [vmem:[%s1509 + $0x8] sm:$0xff]
        %v1512 = vld [vmem:[%s1509 + $0x10] sm:$0xff]
        %v1513 = vld [vmem:[%s1509 + $0x18] sm:$0xff]
        %v1514 = vld [vmem:[%s1509 + $0x20] sm:$0xff]
        %v1515 = vld [vmem:[%s1509 + $0x28] sm:$0xff]
        %v1516 = vld [vmem:[%s1509 + $0x30] sm:$0xff]
        %v1517 = vld [vmem:[%s1509 + $0x38] sm:$0xff]
        %v1518 = vld [vmem:[%s1509 + $0x40] sm:$0xff]
        %v1519 = vld [vmem:[%s1509 + $0x48] sm:$0xff]
        %v1520 = vld [vmem:[%s1509 + $0x50] sm:$0xff]
        %v1521 = vld [vmem:[%s1509 + $0x58] sm:$0xff]
        %v1522 = vld [vmem:[%s1509 + $0x60] sm:$0xff]
        %v1523 = vld [vmem:[%s1509 + $0x68] sm:$0xff]
        %v1524 = vld [vmem:[%s1509 + $0x70] sm:$0xff]
        %v1525 = vld [vmem:[%s1509 + $0x78] sm:$0xff]
        %1526 = vmatpush.msra.mxu0 %v1525
        %1527 = vmatpush.msra.mxu0 %v1524
        %1528 = vmatpush.msra.mxu0 %v1523
        %1529 = vmatpush.msra.mxu0 %v1522
        %1530 = vmatpush.msra.mxu0 %v1521
        %1531 = vmatpush.msra.mxu0 %v1520
        %1532 = vmatpush.msra.mxu0 %v1519
        %1533 = vmatpush.msra.mxu0 %v1518
        %1534 = vmatpush.msra.mxu0 %v1517
        %1535 = vmatpush.msra.mxu0 %v1516
        %1536 = vmatpush.msra.mxu0 %v1515
        %1537 = vmatpush.msra.mxu0 %v1514
        %1538 = vmatpush.msra.mxu0 %v1513
        %1539 = vmatpush.msra.mxu0 %v1512
        %1540 = vmatpush.msra.mxu0 %v1511
        %1541 = vmatpush.msra.mxu0 %v1510
        %1542 = vmatmul.f32.gmra.mxu0 %v1508
        %v1543 = vpop.f32.mrf.mxu0
        %v1544 = vadd.f32 0.0, %v1543
        %1545 = vdwg.mxu0
        %1546 = vmatpush.msra.mxu0 %v1507
        %1547 = vmatpush.msra.mxu0 %v1506
        %1548 = vmatpush.msra.mxu0 %v1505
        %1549 = vmatpush.msra.mxu0 %v1504
        %1550 = vmatpush.msra.mxu0 %v1503
        %1551 = vmatpush.msra.mxu0 %v1502
        %1552 = vmatpush.msra.mxu0 %v1501
        %1553 = vmatpush.msra.mxu0 %v1500
        %1554 = vmatpush.msra.mxu0 %v1499
        %1555 = vmatpush.msra.mxu0 %v1498
        %1556 = vmatpush.msra.mxu0 %v1497
        %1557 = vmatpush.msra.mxu0 %v1496
        %1558 = vmatpush.msra.mxu0 %v1495
        %1559 = vmatpush.msra.mxu0 %v1494
        %1560 = vmatpush.msra.mxu0 %v1493
        %1561 = vmatpush.msra.mxu0 %v1492
        %1562 = vmatmul.f32.gmra.mxu0 %v1491
        %v1563 = vpop.f32.mrf.mxu0
        %v1564 = vadd.f32 %v1544, %v1563
        %1565 = vdwg.mxu0
        %v1566 = vld [vmem:[#allocation4 + $0x2] sm:$0xf]
        %s1567 = scalar_lea.vmem [#allocation15], 256
        %v1568 = vld [vmem:[%s1567] sm:$0xff]
        %v1569 = vld [vmem:[%s1567 + $0x8] sm:$0xff]
        %v1570 = vld [vmem:[%s1567 + $0x10] sm:$0xff]
        %v1571 = vld [vmem:[%s1567 + $0x18] sm:$0xff]
        %v1572 = vld [vmem:[%s1567 + $0x20] sm:$0xff]
        %v1573 = vld [vmem:[%s1567 + $0x28] sm:$0xff]
        %v1574 = vld [vmem:[%s1567 + $0x30] sm:$0xff]
        %v1575 = vld [vmem:[%s1567 + $0x38] sm:$0xff]
        %v1576 = vld [vmem:[%s1567 + $0x40] sm:$0xff]
        %v1577 = vld [vmem:[%s1567 + $0x48] sm:$0xff]
        %v1578 = vld [vmem:[%s1567 + $0x50] sm:$0xff]
        %v1579 = vld [vmem:[%s1567 + $0x58] sm:$0xff]
        %v1580 = vld [vmem:[%s1567 + $0x60] sm:$0xff]
        %v1581 = vld [vmem:[%s1567 + $0x68] sm:$0xff]
        %v1582 = vld [vmem:[%s1567 + $0x70] sm:$0xff]
        %v1583 = vld [vmem:[%s1567 + $0x78] sm:$0xff]
        %1584 = vmatpush.msra.mxu0 %v1583
        %1585 = vmatpush.msra.mxu0 %v1582
        %1586 = vmatpush.msra.mxu0 %v1581
        %1587 = vmatpush.msra.mxu0 %v1580
        %1588 = vmatpush.msra.mxu0 %v1579
        %1589 = vmatpush.msra.mxu0 %v1578
        %1590 = vmatpush.msra.mxu0 %v1577
        %1591 = vmatpush.msra.mxu0 %v1576
        %1592 = vmatpush.msra.mxu0 %v1575
        %1593 = vmatpush.msra.mxu0 %v1574
        %1594 = vmatpush.msra.mxu0 %v1573
        %1595 = vmatpush.msra.mxu0 %v1572
        %1596 = vmatpush.msra.mxu0 %v1571
        %1597 = vmatpush.msra.mxu0 %v1570
        %1598 = vmatpush.msra.mxu0 %v1569
        %1599 = vmatpush.msra.mxu0 %v1568
        %1600 = vmatmul.f32.gmra.mxu0 %v1566
        %v1601 = vpop.f32.mrf.mxu0
        %v1602 = vadd.f32 0.0, %v1601
        %1603 = vdwg.mxu0
        %v1604 = vadd.f32 %v1564, %v1602
        %v1605 = vld [vmem:[%s11] sm:$0x1]
        %v1607 = vperm.slane %v1605, 0
        %v1609 = vadd.f32 %v1604, %v1607
        %v1610 = vmax.f32 %v1609, 0.0
        %1611 = vst [vmem:[#allocation5] sm:$0xf] %v1610
        %v1612 = vld [vmem:[#allocation5] sm:$0x1]
        %v1613 = vld [vmem:[#allocation17] sm:$0xff]
        %v1614 = vld [vmem:[#allocation17 + $0x8] sm:$0xff]
        %v1615 = vld [vmem:[#allocation17 + $0x10] sm:$0xff]
        %v1616 = vld [vmem:[#allocation17 + $0x18] sm:$0xff]
        %v1617 = vld [vmem:[#allocation17 + $0x20] sm:$0xff]
        %v1618 = vld [vmem:[#allocation17 + $0x28] sm:$0xff]
        %v1619 = vld [vmem:[#allocation17 + $0x30] sm:$0xff]
        %v1620 = vld [vmem:[#allocation17 + $0x38] sm:$0xff]
        %v1621 = vld [vmem:[#allocation17 + $0x40] sm:$0xff]
        %v1622 = vld [vmem:[#allocation17 + $0x48] sm:$0xff]
        %v1623 = vld [vmem:[#allocation17 + $0x50] sm:$0xff]
        %v1624 = vld [vmem:[#allocation17 + $0x58] sm:$0xff]
        %v1625 = vld [vmem:[#allocation17 + $0x60] sm:$0xff]
        %v1626 = vld [vmem:[#allocation17 + $0x68] sm:$0xff]
        %v1627 = vld [vmem:[#allocation17 + $0x70] sm:$0xff]
        %v1628 = vld [vmem:[#allocation17 + $0x78] sm:$0xff]
        %v1629 = vld [vmem:[#allocation5 + $0x1] sm:$0x1]
        %s1630 = scalar_lea.vmem [#allocation17], 128
        %v1631 = vld [vmem:[%s1630] sm:$0xff]
        %v1632 = vld [vmem:[%s1630 + $0x8] sm:$0xff]
        %v1633 = vld [vmem:[%s1630 + $0x10] sm:$0xff]
        %v1634 = vld [vmem:[%s1630 + $0x18] sm:$0xff]
        %v1635 = vld [vmem:[%s1630 + $0x20] sm:$0xff]
        %v1636 = vld [vmem:[%s1630 + $0x28] sm:$0xff]
        %v1637 = vld [vmem:[%s1630 + $0x30] sm:$0xff]
        %v1638 = vld [vmem:[%s1630 + $0x38] sm:$0xff]
        %v1639 = vld [vmem:[%s1630 + $0x40] sm:$0xff]
        %v1640 = vld [vmem:[%s1630 + $0x48] sm:$0xff]
        %v1641 = vld [vmem:[%s1630 + $0x50] sm:$0xff]
        %v1642 = vld [vmem:[%s1630 + $0x58] sm:$0xff]
        %v1643 = vld [vmem:[%s1630 + $0x60] sm:$0xff]
        %v1644 = vld [vmem:[%s1630 + $0x68] sm:$0xff]
        %v1645 = vld [vmem:[%s1630 + $0x70] sm:$0xff]
        %v1646 = vld [vmem:[%s1630 + $0x78] sm:$0xff]
        %1647 = vmatpush.msra.mxu0 %v1646
        %1648 = vmatpush.msra.mxu0 %v1645
        %1649 = vmatpush.msra.mxu0 %v1644
        %1650 = vmatpush.msra.mxu0 %v1643
        %1651 = vmatpush.msra.mxu0 %v1642
        %1652 = vmatpush.msra.mxu0 %v1641
        %1653 = vmatpush.msra.mxu0 %v1640
        %1654 = vmatpush.msra.mxu0 %v1639
        %1655 = vmatpush.msra.mxu0 %v1638
        %1656 = vmatpush.msra.mxu0 %v1637
        %1657 = vmatpush.msra.mxu0 %v1636
        %1658 = vmatpush.msra.mxu0 %v1635
        %1659 = vmatpush.msra.mxu0 %v1634
        %1660 = vmatpush.msra.mxu0 %v1633
        %1661 = vmatpush.msra.mxu0 %v1632
        %1662 = vmatpush.msra.mxu0 %v1631
        %1663 = vmatmul.f32.gmra.mxu0 %v1629
        %v1664 = vpop.f32.mrf.mxu0
        %v1665 = vadd.f32 0.0, %v1664
        %1666 = vdwg.mxu0
        %1667 = vmatpush.msra.mxu0 %v1628
        %1668 = vmatpush.msra.mxu0 %v1627
        %1669 = vmatpush.msra.mxu0 %v1626
        %1670 = vmatpush.msra.mxu0 %v1625
        %1671 = vmatpush.msra.mxu0 %v1624
        %1672 = vmatpush.msra.mxu0 %v1623
        %1673 = vmatpush.msra.mxu0 %v1622
        %1674 = vmatpush.msra.mxu0 %v1621
        %1675 = vmatpush.msra.mxu0 %v1620
        %1676 = vmatpush.msra.mxu0 %v1619
        %1677 = vmatpush.msra.mxu0 %v1618
        %1678 = vmatpush.msra.mxu0 %v1617
        %1679 = vmatpush.msra.mxu0 %v1616
        %1680 = vmatpush.msra.mxu0 %v1615
        %1681 = vmatpush.msra.mxu0 %v1614
        %1682 = vmatpush.msra.mxu0 %v1613
        %1683 = vmatmul.f32.gmra.mxu0 %v1612
        %v1684 = vpop.f32.mrf.mxu0
        %v1685 = vadd.f32 %v1665, %v1684
        %1686 = vdwg.mxu0
        %v1687 = vld [vmem:[#allocation5 + $0x2] sm:$0x1]
        %s1688 = scalar_lea.vmem [#allocation17], 256
        %v1689 = vld [vmem:[%s1688] sm:$0xff]
        %v1690 = vld [vmem:[%s1688 + $0x8] sm:$0xff]
        %v1691 = vld [vmem:[%s1688 + $0x10] sm:$0xff]
        %v1692 = vld [vmem:[%s1688 + $0x18] sm:$0xff]
        %v1693 = vld [vmem:[%s1688 + $0x20] sm:$0xff]
        %v1694 = vld [vmem:[%s1688 + $0x28] sm:$0xff]
        %v1695 = vld [vmem:[%s1688 + $0x30] sm:$0xff]
        %v1696 = vld [vmem:[%s1688 + $0x38] sm:$0xff]
        %v1697 = vld [vmem:[%s1688 + $0x40] sm:$0xff]
        %v1698 = vld [vmem:[%s1688 + $0x48] sm:$0xff]
        %v1699 = vld [vmem:[%s1688 + $0x50] sm:$0xff]
        %v1700 = vld [vmem:[%s1688 + $0x58] sm:$0xff]
        %v1701 = vld [vmem:[%s1688 + $0x60] sm:$0xff]
        %v1702 = vld [vmem:[%s1688 + $0x68] sm:$0xff]
        %v1703 = vld [vmem:[%s1688 + $0x70] sm:$0xff]
        %v1704 = vld [vmem:[%s1688 + $0x78] sm:$0xff]
        %1705 = vmatpush.msra.mxu0 %v1704
        %1706 = vmatpush.msra.mxu0 %v1703
        %1707 = vmatpush.msra.mxu0 %v1702
        %1708 = vmatpush.msra.mxu0 %v1701
        %1709 = vmatpush.msra.mxu0 %v1700
        %1710 = vmatpush.msra.mxu0 %v1699
        %1711 = vmatpush.msra.mxu0 %v1698
        %1712 = vmatpush.msra.mxu0 %v1697
        %1713 = vmatpush.msra.mxu0 %v1696
        %1714 = vmatpush.msra.mxu0 %v1695
        %1715 = vmatpush.msra.mxu0 %v1694
        %1716 = vmatpush.msra.mxu0 %v1693
        %1717 = vmatpush.msra.mxu0 %v1692
        %1718 = vmatpush.msra.mxu0 %v1691
        %1719 = vmatpush.msra.mxu0 %v1690
        %1720 = vmatpush.msra.mxu0 %v1689
        %1721 = vmatmul.f32.gmra.mxu0 %v1687
        %v1722 = vpop.f32.mrf.mxu0
        %v1723 = vadd.f32 0.0, %v1722
        %1724 = vdwg.mxu0
        %v1725 = vadd.f32 %v1685, %v1723
        %v1726 = vld [vmem:[#allocation5 + $0x3] sm:$0x1]
        %s1727 = scalar_lea.vmem [#allocation17], 384
        %v1728 = vld [vmem:[%s1727] sm:$0xff]
        %v1729 = vld [vmem:[%s1727 + $0x8] sm:$0xff]
        %v1730 = vld [vmem:[%s1727 + $0x10] sm:$0xff]
        %v1731 = vld [vmem:[%s1727 + $0x18] sm:$0xff]
        %v1732 = vld [vmem:[%s1727 + $0x20] sm:$0xff]
        %v1733 = vld [vmem:[%s1727 + $0x28] sm:$0xff]
        %v1734 = vld [vmem:[%s1727 + $0x30] sm:$0xff]
        %v1735 = vld [vmem:[%s1727 + $0x38] sm:$0xff]
        %v1736 = vld [vmem:[%s1727 + $0x40] sm:$0xff]
        %v1737 = vld [vmem:[%s1727 + $0x48] sm:$0xff]
        %v1738 = vld [vmem:[%s1727 + $0x50] sm:$0xff]
        %v1739 = vld [vmem:[%s1727 + $0x58] sm:$0xff]
        %v1740 = vld [vmem:[%s1727 + $0x60] sm:$0xff]
        %v1741 = vld [vmem:[%s1727 + $0x68] sm:$0xff]
        %v1742 = vld [vmem:[%s1727 + $0x70] sm:$0xff]
        %v1743 = vld [vmem:[%s1727 + $0x78] sm:$0xff]
        %1744 = vmatpush.msra.mxu0 %v1743
        %1745 = vmatpush.msra.mxu0 %v1742
        %1746 = vmatpush.msra.mxu0 %v1741
        %1747 = vmatpush.msra.mxu0 %v1740
        %1748 = vmatpush.msra.mxu0 %v1739
        %1749 = vmatpush.msra.mxu0 %v1738
        %1750 = vmatpush.msra.mxu0 %v1737
        %1751 = vmatpush.msra.mxu0 %v1736
        %1752 = vmatpush.msra.mxu0 %v1735
        %1753 = vmatpush.msra.mxu0 %v1734
        %1754 = vmatpush.msra.mxu0 %v1733
        %1755 = vmatpush.msra.mxu0 %v1732
        %1756 = vmatpush.msra.mxu0 %v1731
        %1757 = vmatpush.msra.mxu0 %v1730
        %1758 = vmatpush.msra.mxu0 %v1729
        %1759 = vmatpush.msra.mxu0 %v1728
        %1760 = vmatmul.f32.gmra.mxu0 %v1726
        %v1761 = vpop.f32.mrf.mxu0
        %v1762 = vadd.f32 0.0, %v1761
        %1763 = vdwg.mxu0
        %v1764 = vadd.f32 %v1725, %v1762
        %v1765 = vld [vmem:[%s13] sm:$0x1]
        %v1766 = vadd.f32 %v1764, %v1765
        %v1767 = vmax.f32 %v1766, 0.0
        %v1768 = vld [vmem:[%s14] sm:$0xff]
        %v1769 = vld [vmem:[%s14 + $0x8] sm:$0xff]
        %v1770 = vld [vmem:[%s14 + $0x10] sm:$0xff]
        %v1771 = vld [vmem:[%s14 + $0x18] sm:$0xff]
        %v1772 = vld [vmem:[%s14 + $0x20] sm:$0xff]
        %v1773 = vld [vmem:[%s14 + $0x28] sm:$0xff]
        %v1774 = vld [vmem:[%s14 + $0x30] sm:$0xff]
        %v1775 = vld [vmem:[%s14 + $0x38] sm:$0xff]
        %v1776 = vld [vmem:[%s14 + $0x40] sm:$0xff]
        %v1777 = vld [vmem:[%s14 + $0x48] sm:$0xff]
        %v1778 = vld [vmem:[%s14 + $0x50] sm:$0xff]
        %v1779 = vld [vmem:[%s14 + $0x58] sm:$0xff]
        %v1780 = vld [vmem:[%s14 + $0x60] sm:$0xff]
        %v1781 = vld [vmem:[%s14 + $0x68] sm:$0xff]
        %v1782 = vld [vmem:[%s14 + $0x70] sm:$0xff]
        %v1783 = vld [vmem:[%s14 + $0x78] sm:$0xff]
        %v1784 = vld [vmem:[%s15] sm:$0x1]
        %1785 = vmatpush.msra.mxu0 %v1783
        %1786 = vmatpush.msra.mxu0 %v1782
        %1787 = vmatpush.msra.mxu0 %v1781
        %1788 = vmatpush.msra.mxu0 %v1780
        %1789 = vmatpush.msra.mxu0 %v1779
        %1790 = vmatpush.msra.mxu0 %v1778
        %1791 = vmatpush.msra.mxu0 %v1777
        %1792 = vmatpush.msra.mxu0 %v1776
        %1793 = vmatpush.msra.mxu0 %v1775
        %1794 = vmatpush.msra.mxu0 %v1774
        %1795 = vmatpush.msra.mxu0 %v1773
        %1796 = vmatpush.msra.mxu0 %v1772
        %1797 = vmatpush.msra.mxu0 %v1771
        %1798 = vmatpush.msra.mxu0 %v1770
        %1799 = vmatpush.msra.mxu0 %v1769
        %1800 = vmatpush.msra.mxu0 %v1768
        %1801 = vmatmul.f32.gmra.mxu0 %v1767
        %v1802 = vpop.f32.mrf.mxu0
        %v1803 = vadd.f32 %v1784, %v1802
        %1804 = vdwg.mxu0
        %1806 = vrot.lane.b32.xlu0 %v1803, 127
        %v1807 = vpop.permute.xlu0 %1806
        %vm1809 = vcmask 40960
        %v1810 = vsel %vm1809, %v1807, 0.0
        %1811 = vadd.xlane.f32.xlu0 %v1810
        %v1812 = vpop.xlane.xlu0 %1811
        %v1813 = vrcp.pop 6.0
        %v1814 = vmul.f32 6.0, %v1813
        %v1815 = vsub.f32 1.0, %v1814
        %v1816 = vmul.f32 %v1813, %v1815
        %v1817 = vadd.f32 %v1813, %v1816
        %vm1818 = vweird.f32 %v1813
        %v1819 = vsel %vm1818, %v1813, %v1817
        %v1820 = vmul.f32 %v1812, %v1819
        %v1821 = vsub.f32 %v1803, %v1820
        %1822 = vset.pattern.permute.xlu0 0
        %1823 = vperm.xlu0 %1822, %v1803
        %v1824 = vpop.permute.xlu0 %1823
        %v1826 = vadd.f32 %v1824, %v1821
        %1828 = vrot.lane.b32.xlu0 %v1826, 127
        %v1829 = vpop.permute.xlu0 %1828
        %1831 = vst.msk [vmem:[%s627] sm:$0x1] %vm1809, %v1829
        %s1832 = sand.u32 %s383, 1
        %s1833 = scalar_lea.sflag [#allocation8], %s1832
        %s1834 = sand.u32 %s383, 1
        %s1835 = scalar_lea.vmem [#allocation18], %s1834
        // Predicated region
        $region113: #{_lambda_.1} parent=83 // pred_check
          %p1836 = pneg %p393
        $region114: #{_lambda_.1} parent=83 // pred_check_branch
          %1838 = sbr.rel (%p1836) target = $region116
        $region115: #{_lambda_.1} parent=83 // pred_region
          %1840 = vsyncadd %s1833, 0
          %s1841 = scalar_lea.hbm %s16, %s34
          %s1843 = sshll.u32 %s1835, 4
          %s1844 = int_to_ptr.vmem [resolvable:$true] %s1843
          %s1845 = sshll.u32 %s1841, 4
          %s1846 = int_to_ptr.hbm [resolvable:$true] %s1845
          %1848 = dma.vmem_to_hbm [thread:$0]  %s1844, 16, %s1846, %s1833
        $region116: #{_lambda_.1} parent=83 // pred_fallthru
          _
      $region84: #{_lambda_.1} parent=5 // pred_fallthru
        _
      %p1849 = scmp.le.s32.totalorder 2, %s29
      // Predicated region
      $region117: #{_lambda_.1} parent=5 // pred_check
        %p1850 = pneg %p1849
      $region118: #{_lambda_.1} parent=5 // pred_check_branch
        %1852 = sbr.rel (%p1850) target = $region120
      $region119: #{_lambda_.1} parent=5 // pred_region
        %s1853 = ssub.s32 %s29, 2
        // Predicated region
        $region121: #{_lambda_.1} parent=119 // pred_check
          %p1854 = pneg %p399
        $region122: #{_lambda_.1} parent=119 // pred_check_branch
          %1856 = sbr.rel (%p1854) target = $region124
        $region123: #{_lambda_.1} parent=119 // pred_region
          %s1857 = sand.u32 %s384, 1
          %s1858 = scalar_lea.sflag [#allocation8], %s1857
          %s1859 = sand.u32 %s384, 1
          %s1860 = scalar_lea.vmem [#allocation18], %s1859
          %1862 = dma.done %s1858, 16
        $region124: #{_lambda_.1} parent=119 // pred_fallthru
          _
      $region120: #{_lambda_.1} parent=5 // pred_fallthru
        _
    $region6: #{_lambda_.1} parent=1 // loop_footer
      %s33 = sadd.s32 1, %s29
    $region7: #{_lambda_.1} parent=1 // loop_footer_branch
      %28 = sbr.rel target = $region3
    $region8: #{_lambda_.1} parent=1 // loop_exit
      _
    %1863 = vsyncpa [#allocation7], 1
    %s1864 = scalar_lea.sflag [#allocation7], 1
    %1865 = vsyncpa %s1864, 1
    %1866 = vsyncpa [#allocation10], 1
    %1867 = vsyncpa [#allocation13], 1
    %1868 = vsyncpa [#allocation16], 1
    %1869 = vsyncpa [#allocation8], 1
    %s1870 = scalar_lea.sflag [#allocation8], 1
    %1871 = vsyncpa %s1870, 1

</llo_original>
